<compile_context>
chip_gen: v6e
topology: v6e:2x2x1
jax: 0.10.0
libtpu: 0.0.40
codegen_flags: <defaults>
</compile_context>

<pallas_src>
import jax
import jax.numpy as jnp
from jax.experimental import pallas as pl
from jax.experimental.pallas import tpu as pltpu


def policy_lr_kernel(rows_ref, cols_ref, lt_ref, rt_ref, res_ref):
    # rows_ref, cols_ref : (1, TB) int32  -- batch tile of row / col indices (lane-dense)
    # lt_ref             : (K, N)  f32    -- L^T, resident in VMEM across the grid
    # rt_ref             : (M, K)  f32    -- R^T, resident in VMEM across the grid
    # res_ref            : (1, TB) f32    -- per-sample results (lane-dense)
    k, n = lt_ref.shape
    m = rt_ref.shape[0]
    tb = rows_ref.shape[1]

    rows = rows_ref[...]                                   # (1, TB) int32
    cols = cols_ref[...]                                   # (1, TB) int32

    # Tiny product matrix P^T = R^T @ L^T  ->  (M, N).  MXU, ~k*n*m MACs.
    pt = jnp.dot(rt_ref[...], lt_ref[...],
                 preferred_element_type=jnp.float32,
                 precision=jax.lax.Precision.HIGHEST)      # (M, N) = (L @ R)^T

    # MXU row-gather: pg[:, b] = P[rows[b], :].  One-hot values are exact 0/1,
    # so the gather is exact.
    oh_rows = (jax.lax.broadcasted_iota(jnp.int32, (n, tb), 0) == rows
               ).astype(jnp.float32)                       # (N, TB)
    pg = jnp.dot(pt, oh_rows,
                 preferred_element_type=jnp.float32,
                 precision=jax.lax.Precision.HIGHEST)      # (M, TB)

    # Per-lane column select (VPU) + reduction over only M sublanes (XLU).
    oh_cols = (jax.lax.broadcasted_iota(jnp.int32, (m, tb), 0) == cols
               ).astype(jnp.float32)                       # (M, TB)
    res_ref[...] = jnp.sum(pg * oh_cols, axis=0, keepdims=True)   # (1, TB)


def policy_lr_forward(L, R, log_sigma, rows, cols, *, tile_b=512):
    """Pallas implementation of PolicyLR.forward((rows, cols))."""
    n, k = L.shape
    m = R.shape[1]
    B = rows.shape[0]

    # Pad the batch so the lane-dense tile (multiple of 128) divides it.
    B_pad = ((B + tile_b - 1) // tile_b) * tile_b
    rows_p = jnp.pad(rows.astype(jnp.int32), (0, B_pad - B)).reshape(1, B_pad)
    cols_p = jnp.pad(cols.astype(jnp.int32), (0, B_pad - B)).reshape(1, B_pad)

    lt = jnp.transpose(L).astype(jnp.float32)              # (K, N) -- tiny, one-time
    rt = jnp.transpose(R).astype(jnp.float32)              # (M, K) -- tiny, one-time

    grid = (B_pad // tile_b,)
    res2d = pl.pallas_call(
        policy_lr_kernel,
        out_shape=jax.ShapeDtypeStruct((1, B_pad), jnp.float32),
        grid=grid,
        in_specs=[
            pl.BlockSpec((1, tile_b), lambda i: (0, i)),   # rows (lane-dense int32)
            pl.BlockSpec((1, tile_b), lambda i: (0, i)),   # cols
            pl.BlockSpec((k, n), lambda i: (0, 0)),        # L^T, whole array in VMEM
            pl.BlockSpec((m, k), lambda i: (0, 0)),        # R^T, whole array in VMEM
        ],
        out_specs=pl.BlockSpec((1, tile_b), lambda i: (0, i)),
        compiler_params=pltpu.CompilerParams(
            dimension_semantics=("parallel",),             # distinct output blocks per step
        ),
    )(rows_p, cols_p, lt, rt)

    res = res2d.reshape(B_pad)[:B]
    # Single-scalar clamp stays in the wrapper (keeps the grid axis free of a
    # shared (0,0) output block that would serialize the "parallel" axis).
    sig = jnp.clip(log_sigma.astype(jnp.float32), -2.5, 0.0)
    return res, sig


if __name__ == "__main__":
    # Small shapes consistent with the module: n=32, m=16, k=128, B=1000 samples.
    n, m, k = 32, 16, 128
    B = 1000
    scale = 1.0

    key = jax.random.PRNGKey(0)
    k_l, k_r, k_rows, k_cols = jax.random.split(key, 4)

    L = scale * jax.random.normal(k_l, (n, k), dtype=jnp.float32)
    R = scale * jax.random.normal(k_r, (k, m), dtype=jnp.float32)
    log_sigma = jnp.zeros((1,), dtype=jnp.float32)

    rows = jax.random.randint(k_rows, (B,), 0, n, dtype=jnp.int32)
    cols = jax.random.randint(k_cols, (B,), 0, m, dtype=jnp.int32)

    res, sig = policy_lr_forward(L, R, log_sigma, rows, cols, tile_b=512)
    res = jax.block_until_ready(res)
    sig = jax.block_until_ready(sig)

    # Pure-JAX reference (mirrors the PyTorch forward exactly).
    ref_res = jnp.sum(L[rows, :] * jnp.transpose(R[:, cols]), axis=-1)
    ref_sig = jnp.clip(log_sigma, -2.5, 0.0)

    assert res.shape == (B,) and sig.shape == (1,)
    assert jnp.allclose(res, ref_res, rtol=1e-4, atol=1e-4), float(
        jnp.max(jnp.abs(res - ref_res))
    )
    assert jnp.allclose(sig, ref_sig)

    print("KERNEL_OK")
</pallas_src>

<mosaic_0001>
module attributes {stable_mosaic.version = 11 : i64} {
  func.func @policy_lr_kernel(%arg0: i32, %arg1: memref<1x512xi32, #tpu.memory_space<vmem>>, %arg2: memref<1x512xi32, #tpu.memory_space<vmem>>, %arg3: memref<128x32xf32, #tpu.memory_space<vmem>>, %arg4: memref<16x128xf32, #tpu.memory_space<vmem>>, %arg5: memref<1x512xf32, #tpu.memory_space<vmem>>) attributes {dimension_semantics = [#tpu.dimension_semantics<parallel>], iteration_bounds = array<i64: 2>, scalar_prefetch = 0 : i64, scratch_operands = 0 : i64, tpu.core_type = #tpu.core_type<tc>, window_params = [{transform_indices = @transform_0, window_bounds = array<i64: 1, 512>}, {transform_indices = @transform_1, window_bounds = array<i64: 1, 512>}, {pipeline_mode = #tpu.pipeline_mode<synchronous>, transform_indices = @transform_2, window_bounds = array<i64: 128, 32>}, {pipeline_mode = #tpu.pipeline_mode<synchronous>, transform_indices = @transform_3, window_bounds = array<i64: 16, 128>}, {transform_indices = @transform_4, window_bounds = array<i64: 1, 512>}]} {
    %c0 = arith.constant 0 : index
    %c0_0 = arith.constant 0 : index
    %0 = vector.load %arg1[%c0, %c0_0] : memref<1x512xi32, #tpu.memory_space<vmem>>, vector<1x512xi32>
    %c0_1 = arith.constant 0 : index
    %c0_2 = arith.constant 0 : index
    %1 = vector.load %arg2[%c0_1, %c0_2] : memref<1x512xi32, #tpu.memory_space<vmem>>, vector<1x512xi32>
    %c0_3 = arith.constant 0 : index
    %c0_4 = arith.constant 0 : index
    %2 = vector.load %arg4[%c0_3, %c0_4] : memref<16x128xf32, #tpu.memory_space<vmem>>, vector<16x128xf32>
    %c0_5 = arith.constant 0 : index
    %c0_6 = arith.constant 0 : index
    %3 = vector.load %arg3[%c0_5, %c0_6] : memref<128x32xf32, #tpu.memory_space<vmem>>, vector<128x32xf32>
    %cst = arith.constant dense<0.000000e+00> : vector<16x32xf32>
    %4 = tpu.matmul %2, %3, %cst {dimension_numbers = #tpu.dot_dimension_numbers<[1], [0], [0], [1], [0, 0, 1, 1], [], []>, precision = #tpu.contract_precision<fp32>} : vector<16x128xf32>, vector<128x32xf32>, vector<16x32xf32> -> vector<16x32xf32>
    %5 = tpu.iota {dimensions = array<i32: 0>} : vector<32x512xi32>
    %6 = vector.broadcast %0 : vector<1x512xi32> to vector<32x512xi32>
    %7 = arith.cmpi eq, %5, %6 : vector<32x512xi32>
    %8 = arith.extui %7 : vector<32x512xi1> to vector<32x512xi32>
    %9 = arith.sitofp %8 : vector<32x512xi32> to vector<32x512xf32>
    %cst_7 = arith.constant dense<0.000000e+00> : vector<16x512xf32>
    %10 = tpu.matmul %4, %9, %cst_7 {dimension_numbers = #tpu.dot_dimension_numbers<[1], [0], [0], [1], [0, 0, 1, 1], [], []>, precision = #tpu.contract_precision<fp32>} : vector<16x32xf32>, vector<32x512xf32>, vector<16x512xf32> -> vector<16x512xf32>
    %11 = tpu.iota {dimensions = array<i32: 0>} : vector<16x512xi32>
    %12 = vector.broadcast %1 : vector<1x512xi32> to vector<16x512xi32>
    %13 = arith.cmpi eq, %11, %12 : vector<16x512xi32>
    %14 = arith.extui %13 : vector<16x512xi1> to vector<16x512xi32>
    %15 = arith.sitofp %14 : vector<16x512xi32> to vector<16x512xf32>
    %16 = arith.mulf %10, %15 : vector<16x512xf32>
    %cst_8 = arith.constant dense<0.000000e+00> : vector<512xf32>
    %17 = vector.multi_reduction <add>, %16, %cst_8 [0] : vector<16x512xf32> to vector<512xf32>
    %18 = vector.shape_cast %17 : vector<512xf32> to vector<1x512xf32>
    %c0_9 = arith.constant 0 : index
    %c0_10 = arith.constant 0 : index
    %19 = vector.load %arg5[%c0_9, %c0_10] : memref<1x512xf32, #tpu.memory_space<vmem>>, vector<1x512xf32>
    tpu.vector_store %arg5[%c0_9, %c0_10], %18 {strides = array<i32>} : memref<1x512xf32, #tpu.memory_space<vmem>>, vector<1x512xf32>,
    return
  }
  func.func @transform_0(%arg0: i32) -> (i32, i32) {
    %c0_i32 = arith.constant 0 : i32
    %c0_i32_0 = arith.constant 0 : i32
    return %c0_i32, %arg0 : i32, i32
  }
  func.func @transform_1(%arg0: i32) -> (i32, i32) {
    %c0_i32 = arith.constant 0 : i32
    %c0_i32_0 = arith.constant 0 : i32
    return %c0_i32, %arg0 : i32, i32
  }
  func.func @transform_2(%arg0: i32) -> (i32, i32) {
    %c0_i32 = arith.constant 0 : i32
    %c0_i32_0 = arith.constant 0 : i32
    %c0_i32_1 = arith.constant 0 : i32
    return %c0_i32, %c0_i32_0 : i32, i32
  }
  func.func @transform_3(%arg0: i32) -> (i32, i32) {
    %c0_i32 = arith.constant 0 : i32
    %c0_i32_0 = arith.constant 0 : i32
    %c0_i32_1 = arith.constant 0 : i32
    return %c0_i32, %c0_i32_0 : i32, i32
  }
  func.func @transform_4(%arg0: i32) -> (i32, i32) {
    %c0_i32 = arith.constant 0 : i32
    %c0_i32_0 = arith.constant 0 : i32
    return %c0_i32, %arg0 : i32, i32
  }
}

</mosaic_0001>

<llo_original>
// kernel: tpu_custom_call.1
$region0: #{tpu_custom_call.1}
  #allocation0 [shape = 'u32[]', space=smem, size = 0x4, offset = 0x4, fixed_abs, tag = 'smem constant byte address 0x4 - core index']
  #allocation1 [shape = 'u32[144,128]{1,0:T(1,128)}', space=vmem, size = 0x12000, scoped, tag = 'internal scratch']
  %s0 = inlined_call_operand.vmem [shape: s32[1,1024], index: 0, kind: input, shape index: {}]
  %s1 = inlined_call_operand.vmem [shape: s32[1,1024], index: 1, kind: input, shape index: {}]
  %s2 = inlined_call_operand.vmem [shape: f32[128,32], index: 2, kind: input, shape index: {}]
  %s3 = inlined_call_operand.vmem [shape: f32[16,128], index: 3, kind: input, shape index: {}]
  %s4 = inlined_call_operand.hbm [shape: f32[1,1024], index: 4, kind: output, shape index: {}]
  %s5 = sld [smem:[#allocation0]]
  $region49: #{tpu_custom_call.1} parent=0
    _
  %s7 = ssub.s32 1, %s5
  %s8 = scalar_select 0, %s7, %s5
  $region1: #{tpu_custom_call.1} parent=0
    #allocation2 [shape = 'u8[4096]{0}', space=vmem, size = 0x1000, scoped, tag = 'output window, operand 0']
    #allocation3 [shape = 's32[2]{0}', space=sflag, size = 0x8, scoped, tag = 'scoped memory for tpu_custom_call.1']
    %9 = vsyncpa [#allocation3], 0
    %s10 = scalar_lea.sflag [#allocation3], 1
    %11 = vsyncpa %s10, 0
    loop: start=0, step=1, limit=4
    $region2: #{tpu_custom_call.1} parent=1 // loop_pre_header
      _
    $region3: #{tpu_custom_call.1} parent=1 // loop_header
      %s13 = sphi 0, %s17
      %p14 = scmp.ge.s32.totalorder %s13, 4
      %s23 = sphi 0, %s25
      %s26 = sphi 0, %s23
      %s27 = sphi 0, %s26
      %s43 = sphi 0, %s27
      %s49 = sphi 0, %s51
      %s52 = sphi 0, %s49
      %s53 = sphi 0, %s52
      %s69 = sphi 0, %s53
      %s73 = sphi 0, %s73
      %s75 = sphi 0, %s73
      %s76 = sphi 0, %s75
      %s90 = sphi 0, %s76
      %s94 = sphi 0, %s94
      %s96 = sphi 0, %s94
      %s97 = sphi 0, %s96
      %s111 = sphi 0, %s97
      %s117 = sphi 0, %s119
      %s120 = sphi 0, %s117
      %s121 = sphi 0, %s120
      %s137 = sphi 0, %s121
    $region4: #{tpu_custom_call.1} parent=1 // loop_header_branch
      %16 = sbr.rel (%p14) target = $region8
    $region5: #{tpu_custom_call.1} parent=1 // loop_body
      %s18 = ssub.s32 %s13, 1
      %s19 = ssub.s32 %s13, 2
      %s20 = sadd.s32 %s13, 1
      %s21 = ssub.s32 %s13, %s20
      %p22 = scmp.eq.s32.totalorder %s21, 0
      %s24 = sadd.s32 %s23, 1
      %s25 = scalar_select %p22, %s23, %s24
      %p28 = pneg %p22
      %p29 = scmp.eq.s32.totalorder %s13, 1
      %p30 = por %p28, %p29
      %p31 = scmp.ne.s32.totalorder %s23, %s26
      %p32 = scmp.eq.s32.totalorder %s13, 0
      %p33 = por %p31, %p32
      %p34 = scmp.ne.s32.totalorder %s23, %s26
      %p35 = scmp.eq.s32.totalorder %s18, 1
      %p36 = por %p34, %p35
      %p37 = scmp.ne.s32.totalorder %s26, %s27
      %p38 = scmp.eq.s32.totalorder %s18, 0
      %p39 = por %p37, %p38
      %p40 = scmp.ne.s32.totalorder %s26, %s27
      %p41 = scmp.eq.s32.totalorder %s19, 1
      %p42 = por %p40, %p41
      %p44 = scmp.ne.s32.totalorder %s27, %s43
      %p45 = scmp.eq.s32.totalorder %s19, 0
      %p46 = por %p44, %p45
      %s47 = ssub.s32 %s13, %s20
      %p48 = scmp.eq.s32.totalorder %s47, 0
      %s50 = sadd.s32 %s49, 1
      %s51 = scalar_select %p48, %s49, %s50
      %p54 = pneg %p48
      %p55 = scmp.eq.s32.totalorder %s13, 1
      %p56 = por %p54, %p55
      %p57 = scmp.ne.s32.totalorder %s49, %s52
      %p58 = scmp.eq.s32.totalorder %s13, 0
      %p59 = por %p57, %p58
      %p60 = scmp.ne.s32.totalorder %s49, %s52
      %p61 = scmp.eq.s32.totalorder %s18, 1
      %p62 = por %p60, %p61
      %p63 = scmp.ne.s32.totalorder %s52, %s53
      %p64 = scmp.eq.s32.totalorder %s18, 0
      %p65 = por %p63, %p64
      %p66 = scmp.ne.s32.totalorder %s52, %s53
      %p67 = scmp.eq.s32.totalorder %s19, 1
      %p68 = por %p66, %p67
      %p70 = scmp.ne.s32.totalorder %s53, %s69
      %p71 = scmp.eq.s32.totalorder %s19, 0
      %p72 = por %p70, %p71
      %s74 = sadd.s32 %s73, 1
      %p77 = scmp.eq.s32.totalorder %s13, 1
      %p78 = scmp.ne.s32.totalorder %s73, %s75
      %p79 = scmp.eq.s32.totalorder %s13, 0
      %p80 = por %p78, %p79
      %p81 = scmp.ne.s32.totalorder %s73, %s75
      %p82 = scmp.eq.s32.totalorder %s18, 1
      %p83 = por %p81, %p82
      %p84 = scmp.ne.s32.totalorder %s75, %s76
      %p85 = scmp.eq.s32.totalorder %s18, 0
      %p86 = por %p84, %p85
      %p87 = scmp.ne.s32.totalorder %s75, %s76
      %p88 = scmp.eq.s32.totalorder %s19, 1
      %p89 = por %p87, %p88
      %p91 = scmp.ne.s32.totalorder %s76, %s90
      %p92 = scmp.eq.s32.totalorder %s19, 0
      %p93 = por %p91, %p92
      %s95 = sadd.s32 %s94, 1
      %p98 = scmp.eq.s32.totalorder %s13, 1
      %p99 = scmp.ne.s32.totalorder %s94, %s96
      %p100 = scmp.eq.s32.totalorder %s13, 0
      %p101 = por %p99, %p100
      %p102 = scmp.ne.s32.totalorder %s94, %s96
      %p103 = scmp.eq.s32.totalorder %s18, 1
      %p104 = por %p102, %p103
      %p105 = scmp.ne.s32.totalorder %s96, %s97
      %p106 = scmp.eq.s32.totalorder %s18, 0
      %p107 = por %p105, %p106
      %p108 = scmp.ne.s32.totalorder %s96, %s97
      %p109 = scmp.eq.s32.totalorder %s19, 1
      %p110 = por %p108, %p109
      %p112 = scmp.ne.s32.totalorder %s97, %s111
      %p113 = scmp.eq.s32.totalorder %s19, 0
      %p114 = por %p112, %p113
      %s115 = ssub.s32 %s13, %s20
      %p116 = scmp.eq.s32.totalorder %s115, 0
      %s118 = sadd.s32 %s117, 1
      %s119 = scalar_select %p116, %s117, %s118
      %p122 = pneg %p116
      %p123 = scmp.eq.s32.totalorder %s13, 1
      %p124 = por %p122, %p123
      %p125 = scmp.ne.s32.totalorder %s117, %s120
      %p126 = scmp.eq.s32.totalorder %s13, 0
      %p127 = por %p125, %p126
      %p128 = scmp.ne.s32.totalorder %s117, %s120
      %p129 = scmp.eq.s32.totalorder %s18, 1
      %p130 = por %p128, %p129
      %p131 = scmp.ne.s32.totalorder %s120, %s121
      %p132 = scmp.eq.s32.totalorder %s18, 0
      %p133 = por %p131, %p132
      %p134 = scmp.ne.s32.totalorder %s120, %s121
      %p135 = scmp.eq.s32.totalorder %s19, 1
      %p136 = por %p134, %p135
      %p138 = scmp.ne.s32.totalorder %s121, %s137
      %p139 = scmp.eq.s32.totalorder %s19, 0
      %p140 = por %p138, %p139
      %p141 = scmp.le.s32.totalorder 1, %s13
      %p142 = scmp.lt.s32.totalorder %s13, 3
      %p143 = pnand %p141, %p142
      %p144 = pneg %p143
      // Predicated region
      $region9: #{tpu_custom_call.1} parent=5 // pred_check
        _
      $region10: #{tpu_custom_call.1} parent=5 // pred_check_branch
        %146 = sbr.rel (%p143) target = $region12
      $region11: #{tpu_custom_call.1} parent=5 // pred_region
        %s147 = ssub.s32 %s13, 1
        // Predicated region
        $region13: #{tpu_custom_call.1} parent=11 // pred_check
          %p148 = pneg %p86
        $region14: #{tpu_custom_call.1} parent=11 // pred_check_branch
          %150 = sbr.rel (%p148) target = $region16
        $region15: #{tpu_custom_call.1} parent=11 // pred_region
          _
        $region16: #{tpu_custom_call.1} parent=11 // pred_fallthru
          _
        // Predicated region
        $region17: #{tpu_custom_call.1} parent=11 // pred_check
          %p151 = pneg %p107
        $region18: #{tpu_custom_call.1} parent=11 // pred_check_branch
          %153 = sbr.rel (%p151) target = $region20
        $region19: #{tpu_custom_call.1} parent=11 // pred_region
          _
        $region20: #{tpu_custom_call.1} parent=11 // pred_fallthru
          _
      $region12: #{tpu_custom_call.1} parent=5 // pred_fallthru
        _
      %p154 = scmp.lt.s32.totalorder %s13, 2
      // Predicated region
      $region21: #{tpu_custom_call.1} parent=5 // pred_check
        %p155 = pneg %p154
      $region22: #{tpu_custom_call.1} parent=5 // pred_check_branch
        %157 = sbr.rel (%p155) target = $region24
      $region23: #{tpu_custom_call.1} parent=5 // pred_region
        // Predicated region
        $region25: #{tpu_custom_call.1} parent=23 // pred_check
          %p158 = pneg %p33
        $region26: #{tpu_custom_call.1} parent=23 // pred_check_branch
          %160 = sbr.rel (%p158) target = $region28
        $region27: #{tpu_custom_call.1} parent=23 // pred_region
          %s161 = smul.u32 4, %s13
          %p162 = scmp.lt.s32.totalorder %s161, 7
          %s163 = scalar_select %p162, %s161, 7
          %s164 = scalar_lea.vmem %s0, %s163
          %s165 = smul.u32 4, %s13
        $region28: #{tpu_custom_call.1} parent=23 // pred_fallthru
          _
        // Predicated region
        $region29: #{tpu_custom_call.1} parent=23 // pred_check
          %p166 = pneg %p59
        $region30: #{tpu_custom_call.1} parent=23 // pred_check_branch
          %168 = sbr.rel (%p166) target = $region32
        $region31: #{tpu_custom_call.1} parent=23 // pred_region
          %s169 = smul.u32 4, %s13
          %p170 = scmp.lt.s32.totalorder %s169, 7
          %s171 = scalar_select %p170, %s169, 7
          %s172 = scalar_lea.vmem %s1, %s171
          %s173 = smul.u32 4, %s13
        $region32: #{tpu_custom_call.1} parent=23 // pred_fallthru
          _
      $region24: #{tpu_custom_call.1} parent=5 // pred_fallthru
        _
      %p174 = scmp.le.s32.totalorder 1, %s13
      %p175 = scmp.lt.s32.totalorder %s13, 3
      %p176 = pnand %p174, %p175
      %p177 = pneg %p176
      // Predicated region
      $region33: #{tpu_custom_call.1} parent=5 // pred_check
        _
      $region34: #{tpu_custom_call.1} parent=5 // pred_check_branch
        %179 = sbr.rel (%p176) target = $region36
      $region35: #{tpu_custom_call.1} parent=5 // pred_region
        %s180 = ssub.s32 %s13, 1
        %s181 = smul.u32 4, %s18
        %p182 = scmp.lt.s32.totalorder %s181, 7
        %s183 = scalar_select %p182, %s181, 7
        %s184 = scalar_lea.vmem %s0, %s183
        %p185 = pneg %p39
        %p186 = pneg %p36
        %s187 = smul.u32 4, %s18
        %p188 = scmp.lt.s32.totalorder %s187, 7
        %s189 = scalar_select %p188, %s187, 7
        %s190 = scalar_lea.vmem %s1, %s189
        %p191 = pneg %p65
        %p192 = pneg %p62
        %p193 = pneg %p86
        %p194 = pneg %p83
        %p195 = pneg %p107
        %p196 = pneg %p104
        %p197 = pneg %p133
        %p198 = pneg %p130
        %s199 = sand.u32 %s120, 1
        %s200 = scalar_lea.sflag [#allocation3], %s199
        %s201 = sand.u32 %s120, 1
        %s202 = smul.addr %s201, 4
        %s203 = scalar_lea.vmem [#allocation2], %s202
        %s204 = smul.u32 4, %s18
        %p205 = scmp.lt.s32.totalorder %s204, 7
        %s206 = scalar_select %p205, %s204, 7
        %s207 = scalar_lea.vmem %s0, %s206
        %s208 = smul.u32 4, %s18
        %s209 = smul.u32 4, %s18
        %p210 = scmp.lt.s32.totalorder %s209, 7
        %s211 = scalar_select %p210, %s209, 7
        %s212 = scalar_lea.vmem %s1, %s211
        %s213 = smul.u32 4, %s18
        %s214 = smul.u32 4, %s18
        %v215 = vld [vmem:[%s207] sm:$0xf]
        %v216 = vld [vmem:[%s212] sm:$0xf]
        %v217 = vld [vmem:[%s3] sm:$0xff]
        %v218 = vld [vmem:[%s3 + $0x8] sm:$0xff]
        %v219 = vld [vmem:[%s2] sm:$0xff]
        %v220 = vld [vmem:[%s2 + $0x8] sm:$0xff]
        %v221 = vld [vmem:[%s2 + $0x10] sm:$0xff]
        %v222 = vld [vmem:[%s2 + $0x18] sm:$0xff]
        %v223 = vld [vmem:[%s2 + $0x20] sm:$0xff]
        %v224 = vld [vmem:[%s2 + $0x28] sm:$0xff]
        %v225 = vld [vmem:[%s2 + $0x30] sm:$0xff]
        %v226 = vld [vmem:[%s2 + $0x38] sm:$0xff]
        %v227 = vld [vmem:[%s2 + $0x40] sm:$0xff]
        %v228 = vld [vmem:[%s2 + $0x48] sm:$0xff]
        %v229 = vld [vmem:[%s2 + $0x50] sm:$0xff]
        %v230 = vld [vmem:[%s2 + $0x58] sm:$0xff]
        %v231 = vld [vmem:[%s2 + $0x60] sm:$0xff]
        %v232 = vld [vmem:[%s2 + $0x68] sm:$0xff]
        %v233 = vld [vmem:[%s2 + $0x70] sm:$0xff]
        %v234 = vld [vmem:[%s2 + $0x78] sm:$0xff]
        %235 = vmatprep.subr.mxu0 0.0
        %v236 = vand.u32 %v234, 4294901760
        %237 = vmatpush1.msra.mxu0 %v236
        %238 = vmatprep.subr.mxu0 0.0
        %v239 = vand.u32 %v233, 4294901760
        %240 = vmatpush1.msra.mxu0 %v239
        %241 = vmatprep.subr.mxu0 0.0
        %v242 = vand.u32 %v232, 4294901760
        %243 = vmatpush1.msra.mxu0 %v242
        %244 = vmatprep.subr.mxu0 0.0
        %v245 = vand.u32 %v231, 4294901760
        %246 = vmatpush1.msra.mxu0 %v245
        %247 = vmatprep.subr.mxu0 0.0
        %v248 = vand.u32 %v230, 4294901760
        %249 = vmatpush1.msra.mxu0 %v248
        %250 = vmatprep.subr.mxu0 0.0
        %v251 = vand.u32 %v229, 4294901760
        %252 = vmatpush1.msra.mxu0 %v251
        %253 = vmatprep.subr.mxu0 0.0
        %v254 = vand.u32 %v228, 4294901760
        %255 = vmatpush1.msra.mxu0 %v254
        %256 = vmatprep.subr.mxu0 0.0
        %v257 = vand.u32 %v227, 4294901760
        %258 = vmatpush1.msra.mxu0 %v257
        %259 = vmatprep.subr.mxu0 0.0
        %v260 = vand.u32 %v226, 4294901760
        %261 = vmatpush1.msra.mxu0 %v260
        %262 = vmatprep.subr.mxu0 0.0
        %v263 = vand.u32 %v225, 4294901760
        %264 = vmatpush1.msra.mxu0 %v263
        %265 = vmatprep.subr.mxu0 0.0
        %v266 = vand.u32 %v224, 4294901760
        %267 = vmatpush1.msra.mxu0 %v266
        %268 = vmatprep.subr.mxu0 0.0
        %v269 = vand.u32 %v223, 4294901760
        %270 = vmatpush1.msra.mxu0 %v269
        %271 = vmatprep.subr.mxu0 0.0
        %v272 = vand.u32 %v222, 4294901760
        %273 = vmatpush1.msra.mxu0 %v272
        %274 = vmatprep.subr.mxu0 0.0
        %v275 = vand.u32 %v221, 4294901760
        %276 = vmatpush1.msra.mxu0 %v275
        %277 = vmatprep.subr.mxu0 0.0
        %v278 = vand.u32 %v220, 4294901760
        %279 = vmatpush1.msra.mxu0 %v278
        %280 = vmatprep.subr.mxu0 0.0
        %v281 = vand.u32 %v219, 4294901760
        %282 = vmatpush1.msra.mxu0 %v281
        %283 = vmatprep.subr.mxu0 0.0
        %284 = vmatpush2.msra.mxu0 0.0
        %285 = vmatprep.subr.mxu0 0.0
        %286 = vmatpush2.msra.mxu0 0.0
        %287 = vmatprep.subr.mxu0 0.0
        %288 = vmatpush2.msra.mxu0 0.0
        %289 = vmatprep.subr.mxu0 0.0
        %290 = vmatpush2.msra.mxu0 0.0
        %291 = vmatprep.subr.mxu0 0.0
        %292 = vmatpush2.msra.mxu0 0.0
        %293 = vmatprep.subr.mxu0 0.0
        %294 = vmatpush2.msra.mxu0 0.0
        %295 = vmatprep.subr.mxu0 0.0
        %296 = vmatpush2.msra.mxu0 0.0
        %297 = vmatprep.subr.mxu0 0.0
        %298 = vmatpush2.msra.mxu0 0.0
        %299 = vmatprep.subr.mxu0 0.0
        %300 = vmatpush2.msra.mxu0 0.0
        %301 = vmatprep.subr.mxu0 0.0
        %302 = vmatpush2.msra.mxu0 0.0
        %303 = vmatprep.subr.mxu0 0.0
        %304 = vmatpush2.msra.mxu0 0.0
        %305 = vmatprep.subr.mxu0 0.0
        %306 = vmatpush2.msra.mxu0 0.0
        %307 = vmatprep.subr.mxu0 0.0
        %308 = vmatpush2.msra.mxu0 0.0
        %309 = vmatprep.subr.mxu0 0.0
        %310 = vmatpush2.msra.mxu0 0.0
        %311 = vmatprep.subr.mxu0 0.0
        %312 = vmatpush2.msra.mxu0 0.0
        %313 = vmatprep.subr.mxu0 0.0
        %314 = vmatpush2.msra.mxu0 0.0
        %315 = vmatprep.mubr.f32.mxu0 0.0
        %v316 = vand.u32 %v217, 4294901760
        %v317 = vsub.f32 %v217, %v316
        %v318 = vand.u32 %v317, 4294901760
        %v319 = vsub.f32 %v317, %v318
        %v320 = vand.u32 %v319, 4294901760
        %321 = vmatmul.mubr.f32.gmra.mxu0 %v320
        %v322 = vpop.f32.mrf.mxu0
        %v323 = vadd.f32 0.0, %v322
        %v324 = vpop.f32.mrf.mxu0
        %325 = vmatprep.mubr.f32.mxu0 0.0
        %v326 = vand.u32 %v218, 4294901760
        %v327 = vsub.f32 %v218, %v326
        %v328 = vand.u32 %v327, 4294901760
        %v329 = vsub.f32 %v327, %v328
        %v330 = vand.u32 %v329, 4294901760
        %331 = vmatmul.mubr.f32.gmra.mxu0 %v330
        %v332 = vpop.f32.mrf.mxu0
        %v333 = vadd.f32 0.0, %v332
        %v334 = vpop.f32.mrf.mxu0
        %335 = vdwg.mxu0
        %336 = vmatprep.subr.mxu0 0.0
        %v337 = vand.u32 %v234, 4294901760
        %v338 = vsub.f32 %v234, %v337
        %v339 = vand.u32 %v338, 4294901760
        %v340 = vsub.f32 %v338, %v339
        %v341 = vand.u32 %v340, 4294901760
        %342 = vmatpush1.msra.mxu0 %v341
        %343 = vmatprep.subr.mxu0 0.0
        %v344 = vand.u32 %v233, 4294901760
        %v345 = vsub.f32 %v233, %v344
        %v346 = vand.u32 %v345, 4294901760
        %v347 = vsub.f32 %v345, %v346
        %v348 = vand.u32 %v347, 4294901760
        %349 = vmatpush1.msra.mxu0 %v348
        %350 = vmatprep.subr.mxu0 0.0
        %v351 = vand.u32 %v232, 4294901760
        %v352 = vsub.f32 %v232, %v351
        %v353 = vand.u32 %v352, 4294901760
        %v354 = vsub.f32 %v352, %v353
        %v355 = vand.u32 %v354, 4294901760
        %356 = vmatpush1.msra.mxu0 %v355
        %357 = vmatprep.subr.mxu0 0.0
        %v358 = vand.u32 %v231, 4294901760
        %v359 = vsub.f32 %v231, %v358
        %v360 = vand.u32 %v359, 4294901760
        %v361 = vsub.f32 %v359, %v360
        %v362 = vand.u32 %v361, 4294901760
        %363 = vmatpush1.msra.mxu0 %v362
        %364 = vmatprep.subr.mxu0 0.0
        %v365 = vand.u32 %v230, 4294901760
        %v366 = vsub.f32 %v230, %v365
        %v367 = vand.u32 %v366, 4294901760
        %v368 = vsub.f32 %v366, %v367
        %v369 = vand.u32 %v368, 4294901760
        %370 = vmatpush1.msra.mxu0 %v369
        %371 = vmatprep.subr.mxu0 0.0
        %v372 = vand.u32 %v229, 4294901760
        %v373 = vsub.f32 %v229, %v372
        %v374 = vand.u32 %v373, 4294901760
        %v375 = vsub.f32 %v373, %v374
        %v376 = vand.u32 %v375, 4294901760
        %377 = vmatpush1.msra.mxu0 %v376
        %378 = vmatprep.subr.mxu0 0.0
        %v379 = vand.u32 %v228, 4294901760
        %v380 = vsub.f32 %v228, %v379
        %v381 = vand.u32 %v380, 4294901760
        %v382 = vsub.f32 %v380, %v381
        %v383 = vand.u32 %v382, 4294901760
        %384 = vmatpush1.msra.mxu0 %v383
        %385 = vmatprep.subr.mxu0 0.0
        %v386 = vand.u32 %v227, 4294901760
        %v387 = vsub.f32 %v227, %v386
        %v388 = vand.u32 %v387, 4294901760
        %v389 = vsub.f32 %v387, %v388
        %v390 = vand.u32 %v389, 4294901760
        %391 = vmatpush1.msra.mxu0 %v390
        %392 = vmatprep.subr.mxu0 0.0
        %v393 = vand.u32 %v226, 4294901760
        %v394 = vsub.f32 %v226, %v393
        %v395 = vand.u32 %v394, 4294901760
        %v396 = vsub.f32 %v394, %v395
        %v397 = vand.u32 %v396, 4294901760
        %398 = vmatpush1.msra.mxu0 %v397
        %399 = vmatprep.subr.mxu0 0.0
        %v400 = vand.u32 %v225, 4294901760
        %v401 = vsub.f32 %v225, %v400
        %v402 = vand.u32 %v401, 4294901760
        %v403 = vsub.f32 %v401, %v402
        %v404 = vand.u32 %v403, 4294901760
        %405 = vmatpush1.msra.mxu0 %v404
        %406 = vmatprep.subr.mxu0 0.0
        %v407 = vand.u32 %v224, 4294901760
        %v408 = vsub.f32 %v224, %v407
        %v409 = vand.u32 %v408, 4294901760
        %v410 = vsub.f32 %v408, %v409
        %v411 = vand.u32 %v410, 4294901760
        %412 = vmatpush1.msra.mxu0 %v411
        %413 = vmatprep.subr.mxu0 0.0
        %v414 = vand.u32 %v223, 4294901760
        %v415 = vsub.f32 %v223, %v414
        %v416 = vand.u32 %v415, 4294901760
        %v417 = vsub.f32 %v415, %v416
        %v418 = vand.u32 %v417, 4294901760
        %419 = vmatpush1.msra.mxu0 %v418
        %420 = vmatprep.subr.mxu0 0.0
        %v421 = vand.u32 %v222, 4294901760
        %v422 = vsub.f32 %v222, %v421
        %v423 = vand.u32 %v422, 4294901760
        %v424 = vsub.f32 %v422, %v423
        %v425 = vand.u32 %v424, 4294901760
        %426 = vmatpush1.msra.mxu0 %v425
        %427 = vmatprep.subr.mxu0 0.0
        %v428 = vand.u32 %v221, 4294901760
        %v429 = vsub.f32 %v221, %v428
        %v430 = vand.u32 %v429, 4294901760
        %v431 = vsub.f32 %v429, %v430
        %v432 = vand.u32 %v431, 4294901760
        %433 = vmatpush1.msra.mxu0 %v432
        %434 = vmatprep.subr.mxu0 0.0
        %v435 = vand.u32 %v220, 4294901760
        %v436 = vsub.f32 %v220, %v435
        %v437 = vand.u32 %v436, 4294901760
        %v438 = vsub.f32 %v436, %v437
        %v439 = vand.u32 %v438, 4294901760
        %440 = vmatpush1.msra.mxu0 %v439
        %441 = vmatprep.subr.mxu0 0.0
        %v442 = vand.u32 %v219, 4294901760
        %v443 = vsub.f32 %v219, %v442
        %v444 = vand.u32 %v443, 4294901760
        %v445 = vsub.f32 %v443, %v444
        %v446 = vand.u32 %v445, 4294901760
        %447 = vmatpush1.msra.mxu0 %v446
        %448 = vmatprep.subr.mxu0 0.0
        %449 = vmatpush2.msra.mxu0 0.0
        %450 = vmatprep.subr.mxu0 0.0
        %451 = vmatpush2.msra.mxu0 0.0
        %452 = vmatprep.subr.mxu0 0.0
        %453 = vmatpush2.msra.mxu0 0.0
        %454 = vmatprep.subr.mxu0 0.0
        %455 = vmatpush2.msra.mxu0 0.0
        %456 = vmatprep.subr.mxu0 0.0
        %457 = vmatpush2.msra.mxu0 0.0
        %458 = vmatprep.subr.mxu0 0.0
        %459 = vmatpush2.msra.mxu0 0.0
        %460 = vmatprep.subr.mxu0 0.0
        %461 = vmatpush2.msra.mxu0 0.0
        %462 = vmatprep.subr.mxu0 0.0
        %463 = vmatpush2.msra.mxu0 0.0
        %464 = vmatprep.subr.mxu0 0.0
        %465 = vmatpush2.msra.mxu0 0.0
        %466 = vmatprep.subr.mxu0 0.0
        %467 = vmatpush2.msra.mxu0 0.0
        %468 = vmatprep.subr.mxu0 0.0
        %469 = vmatpush2.msra.mxu0 0.0
        %470 = vmatprep.subr.mxu0 0.0
        %471 = vmatpush2.msra.mxu0 0.0
        %472 = vmatprep.subr.mxu0 0.0
        %473 = vmatpush2.msra.mxu0 0.0
        %474 = vmatprep.subr.mxu0 0.0
        %475 = vmatpush2.msra.mxu0 0.0
        %476 = vmatprep.subr.mxu0 0.0
        %477 = vmatpush2.msra.mxu0 0.0
        %478 = vmatprep.subr.mxu0 0.0
        %479 = vmatpush2.msra.mxu0 0.0
        %480 = vmatprep.mubr.f32.mxu0 0.0
        %v481 = vand.u32 %v217, 4294901760
        %482 = vmatmul.mubr.f32.gmra.mxu0 %v481
        %v483 = vpop.f32.mrf.mxu0
        %v484 = vadd.f32 %v323, %v483
        %v485 = vpop.f32.mrf.mxu0
        %486 = vmatprep.mubr.f32.mxu0 0.0
        %v487 = vand.u32 %v218, 4294901760
        %488 = vmatmul.mubr.f32.gmra.mxu0 %v487
        %v489 = vpop.f32.mrf.mxu0
        %v490 = vadd.f32 %v333, %v489
        %v491 = vpop.f32.mrf.mxu0
        %492 = vdwg.mxu0
        %493 = vmatprep.subr.mxu0 0.0
        %v494 = vand.u32 %v234, 4294901760
        %v495 = vsub.f32 %v234, %v494
        %496 = vmatpush1.msra.mxu0 %v495
        %497 = vmatprep.subr.mxu0 0.0
        %v498 = vand.u32 %v233, 4294901760
        %v499 = vsub.f32 %v233, %v498
        %500 = vmatpush1.msra.mxu0 %v499
        %501 = vmatprep.subr.mxu0 0.0
        %v502 = vand.u32 %v232, 4294901760
        %v503 = vsub.f32 %v232, %v502
        %504 = vmatpush1.msra.mxu0 %v503
        %505 = vmatprep.subr.mxu0 0.0
        %v506 = vand.u32 %v231, 4294901760
        %v507 = vsub.f32 %v231, %v506
        %508 = vmatpush1.msra.mxu0 %v507
        %509 = vmatprep.subr.mxu0 0.0
        %v510 = vand.u32 %v230, 4294901760
        %v511 = vsub.f32 %v230, %v510
        %512 = vmatpush1.msra.mxu0 %v511
        %513 = vmatprep.subr.mxu0 0.0
        %v514 = vand.u32 %v229, 4294901760
        %v515 = vsub.f32 %v229, %v514
        %516 = vmatpush1.msra.mxu0 %v515
        %517 = vmatprep.subr.mxu0 0.0
        %v518 = vand.u32 %v228, 4294901760
        %v519 = vsub.f32 %v228, %v518
        %520 = vmatpush1.msra.mxu0 %v519
        %521 = vmatprep.subr.mxu0 0.0
        %v522 = vand.u32 %v227, 4294901760
        %v523 = vsub.f32 %v227, %v522
        %524 = vmatpush1.msra.mxu0 %v523
        %525 = vmatprep.subr.mxu0 0.0
        %v526 = vand.u32 %v226, 4294901760
        %v527 = vsub.f32 %v226, %v526
        %528 = vmatpush1.msra.mxu0 %v527
        %529 = vmatprep.subr.mxu0 0.0
        %v530 = vand.u32 %v225, 4294901760
        %v531 = vsub.f32 %v225, %v530
        %532 = vmatpush1.msra.mxu0 %v531
        %533 = vmatprep.subr.mxu0 0.0
        %v534 = vand.u32 %v224, 4294901760
        %v535 = vsub.f32 %v224, %v534
        %536 = vmatpush1.msra.mxu0 %v535
        %537 = vmatprep.subr.mxu0 0.0
        %v538 = vand.u32 %v223, 4294901760
        %v539 = vsub.f32 %v223, %v538
        %540 = vmatpush1.msra.mxu0 %v539
        %541 = vmatprep.subr.mxu0 0.0
        %v542 = vand.u32 %v222, 4294901760
        %v543 = vsub.f32 %v222, %v542
        %544 = vmatpush1.msra.mxu0 %v543
        %545 = vmatprep.subr.mxu0 0.0
        %v546 = vand.u32 %v221, 4294901760
        %v547 = vsub.f32 %v221, %v546
        %548 = vmatpush1.msra.mxu0 %v547
        %549 = vmatprep.subr.mxu0 0.0
        %v550 = vand.u32 %v220, 4294901760
        %v551 = vsub.f32 %v220, %v550
        %552 = vmatpush1.msra.mxu0 %v551
        %553 = vmatprep.subr.mxu0 0.0
        %v554 = vand.u32 %v219, 4294901760
        %v555 = vsub.f32 %v219, %v554
        %556 = vmatpush1.msra.mxu0 %v555
        %557 = vmatprep.subr.mxu0 0.0
        %558 = vmatpush2.msra.mxu0 0.0
        %559 = vmatprep.subr.mxu0 0.0
        %560 = vmatpush2.msra.mxu0 0.0
        %561 = vmatprep.subr.mxu0 0.0
        %562 = vmatpush2.msra.mxu0 0.0
        %563 = vmatprep.subr.mxu0 0.0
        %564 = vmatpush2.msra.mxu0 0.0
        %565 = vmatprep.subr.mxu0 0.0
        %566 = vmatpush2.msra.mxu0 0.0
        %567 = vmatprep.subr.mxu0 0.0
        %568 = vmatpush2.msra.mxu0 0.0
        %569 = vmatprep.subr.mxu0 0.0
        %570 = vmatpush2.msra.mxu0 0.0
        %571 = vmatprep.subr.mxu0 0.0
        %572 = vmatpush2.msra.mxu0 0.0
        %573 = vmatprep.subr.mxu0 0.0
        %574 = vmatpush2.msra.mxu0 0.0
        %575 = vmatprep.subr.mxu0 0.0
        %576 = vmatpush2.msra.mxu0 0.0
        %577 = vmatprep.subr.mxu0 0.0
        %578 = vmatpush2.msra.mxu0 0.0
        %579 = vmatprep.subr.mxu0 0.0
        %580 = vmatpush2.msra.mxu0 0.0
        %581 = vmatprep.subr.mxu0 0.0
        %582 = vmatpush2.msra.mxu0 0.0
        %583 = vmatprep.subr.mxu0 0.0
        %584 = vmatpush2.msra.mxu0 0.0
        %585 = vmatprep.subr.mxu0 0.0
        %586 = vmatpush2.msra.mxu0 0.0
        %587 = vmatprep.subr.mxu0 0.0
        %588 = vmatpush2.msra.mxu0 0.0
        %589 = vmatprep.mubr.f32.mxu0 0.0
        %v590 = vand.u32 %v217, 4294901760
        %v591 = vsub.f32 %v217, %v590
        %592 = vmatmul.mubr.f32.gmra.mxu0 %v591
        %v593 = vpop.f32.mrf.mxu0
        %v594 = vadd.f32 %v484, %v593
        %v595 = vpop.f32.mrf.mxu0
        %596 = vmatprep.mubr.f32.mxu0 0.0
        %v597 = vand.u32 %v218, 4294901760
        %v598 = vsub.f32 %v218, %v597
        %599 = vmatmul.mubr.f32.gmra.mxu0 %v598
        %v600 = vpop.f32.mrf.mxu0
        %v601 = vadd.f32 %v490, %v600
        %v602 = vpop.f32.mrf.mxu0
        %603 = vdwg.mxu0
        %604 = vmatprep.subr.mxu0 0.0
        %v605 = vand.u32 %v234, 4294901760
        %606 = vmatpush1.msra.mxu0 %v605
        %607 = vmatprep.subr.mxu0 0.0
        %v608 = vand.u32 %v233, 4294901760
        %609 = vmatpush1.msra.mxu0 %v608
        %610 = vmatprep.subr.mxu0 0.0
        %v611 = vand.u32 %v232, 4294901760
        %612 = vmatpush1.msra.mxu0 %v611
        %613 = vmatprep.subr.mxu0 0.0
        %v614 = vand.u32 %v231, 4294901760
        %615 = vmatpush1.msra.mxu0 %v614
        %616 = vmatprep.subr.mxu0 0.0
        %v617 = vand.u32 %v230, 4294901760
        %618 = vmatpush1.msra.mxu0 %v617
        %619 = vmatprep.subr.mxu0 0.0
        %v620 = vand.u32 %v229, 4294901760
        %621 = vmatpush1.msra.mxu0 %v620
        %622 = vmatprep.subr.mxu0 0.0
        %v623 = vand.u32 %v228, 4294901760
        %624 = vmatpush1.msra.mxu0 %v623
        %625 = vmatprep.subr.mxu0 0.0
        %v626 = vand.u32 %v227, 4294901760
        %627 = vmatpush1.msra.mxu0 %v626
        %628 = vmatprep.subr.mxu0 0.0
        %v629 = vand.u32 %v226, 4294901760
        %630 = vmatpush1.msra.mxu0 %v629
        %631 = vmatprep.subr.mxu0 0.0
        %v632 = vand.u32 %v225, 4294901760
        %633 = vmatpush1.msra.mxu0 %v632
        %634 = vmatprep.subr.mxu0 0.0
        %v635 = vand.u32 %v224, 4294901760
        %636 = vmatpush1.msra.mxu0 %v635
        %637 = vmatprep.subr.mxu0 0.0
        %v638 = vand.u32 %v223, 4294901760
        %639 = vmatpush1.msra.mxu0 %v638
        %640 = vmatprep.subr.mxu0 0.0
        %v641 = vand.u32 %v222, 4294901760
        %642 = vmatpush1.msra.mxu0 %v641
        %643 = vmatprep.subr.mxu0 0.0
        %v644 = vand.u32 %v221, 4294901760
        %645 = vmatpush1.msra.mxu0 %v644
        %646 = vmatprep.subr.mxu0 0.0
        %v647 = vand.u32 %v220, 4294901760
        %648 = vmatpush1.msra.mxu0 %v647
        %649 = vmatprep.subr.mxu0 0.0
        %v650 = vand.u32 %v219, 4294901760
        %651 = vmatpush1.msra.mxu0 %v650
        %652 = vmatprep.subr.mxu0 0.0
        %653 = vmatpush2.msra.mxu0 0.0
        %654 = vmatprep.subr.mxu0 0.0
        %655 = vmatpush2.msra.mxu0 0.0
        %656 = vmatprep.subr.mxu0 0.0
        %657 = vmatpush2.msra.mxu0 0.0
        %658 = vmatprep.subr.mxu0 0.0
        %659 = vmatpush2.msra.mxu0 0.0
        %660 = vmatprep.subr.mxu0 0.0
        %661 = vmatpush2.msra.mxu0 0.0
        %662 = vmatprep.subr.mxu0 0.0
        %663 = vmatpush2.msra.mxu0 0.0
        %664 = vmatprep.subr.mxu0 0.0
        %665 = vmatpush2.msra.mxu0 0.0
        %666 = vmatprep.subr.mxu0 0.0
        %667 = vmatpush2.msra.mxu0 0.0
        %668 = vmatprep.subr.mxu0 0.0
        %669 = vmatpush2.msra.mxu0 0.0
        %670 = vmatprep.subr.mxu0 0.0
        %671 = vmatpush2.msra.mxu0 0.0
        %672 = vmatprep.subr.mxu0 0.0
        %673 = vmatpush2.msra.mxu0 0.0
        %674 = vmatprep.subr.mxu0 0.0
        %675 = vmatpush2.msra.mxu0 0.0
        %676 = vmatprep.subr.mxu0 0.0
        %677 = vmatpush2.msra.mxu0 0.0
        %678 = vmatprep.subr.mxu0 0.0
        %679 = vmatpush2.msra.mxu0 0.0
        %680 = vmatprep.subr.mxu0 0.0
        %681 = vmatpush2.msra.mxu0 0.0
        %682 = vmatprep.subr.mxu0 0.0
        %683 = vmatpush2.msra.mxu0 0.0
        %684 = vmatprep.mubr.f32.mxu0 0.0
        %v685 = vand.u32 %v217, 4294901760
        %v686 = vsub.f32 %v217, %v685
        %v687 = vand.u32 %v686, 4294901760
        %688 = vmatmul.mubr.f32.gmra.mxu0 %v687
        %v689 = vpop.f32.mrf.mxu0
        %v690 = vadd.f32 %v594, %v689
        %v691 = vpop.f32.mrf.mxu0
        %692 = vmatprep.mubr.f32.mxu0 0.0
        %v693 = vand.u32 %v218, 4294901760
        %v694 = vsub.f32 %v218, %v693
        %v695 = vand.u32 %v694, 4294901760
        %696 = vmatmul.mubr.f32.gmra.mxu0 %v695
        %v697 = vpop.f32.mrf.mxu0
        %v698 = vadd.f32 %v601, %v697
        %v699 = vpop.f32.mrf.mxu0
        %700 = vdwg.mxu0
        %701 = vmatprep.subr.mxu0 0.0
        %v702 = vand.u32 %v234, 4294901760
        %v703 = vsub.f32 %v234, %v702
        %v704 = vand.u32 %v703, 4294901760
        %705 = vmatpush1.msra.mxu0 %v704
        %706 = vmatprep.subr.mxu0 0.0
        %v707 = vand.u32 %v233, 4294901760
        %v708 = vsub.f32 %v233, %v707
        %v709 = vand.u32 %v708, 4294901760
        %710 = vmatpush1.msra.mxu0 %v709
        %711 = vmatprep.subr.mxu0 0.0
        %v712 = vand.u32 %v232, 4294901760
        %v713 = vsub.f32 %v232, %v712
        %v714 = vand.u32 %v713, 4294901760
        %715 = vmatpush1.msra.mxu0 %v714
        %716 = vmatprep.subr.mxu0 0.0
        %v717 = vand.u32 %v231, 4294901760
        %v718 = vsub.f32 %v231, %v717
        %v719 = vand.u32 %v718, 4294901760
        %720 = vmatpush1.msra.mxu0 %v719
        %721 = vmatprep.subr.mxu0 0.0
        %v722 = vand.u32 %v230, 4294901760
        %v723 = vsub.f32 %v230, %v722
        %v724 = vand.u32 %v723, 4294901760
        %725 = vmatpush1.msra.mxu0 %v724
        %726 = vmatprep.subr.mxu0 0.0
        %v727 = vand.u32 %v229, 4294901760
        %v728 = vsub.f32 %v229, %v727
        %v729 = vand.u32 %v728, 4294901760
        %730 = vmatpush1.msra.mxu0 %v729
        %731 = vmatprep.subr.mxu0 0.0
        %v732 = vand.u32 %v228, 4294901760
        %v733 = vsub.f32 %v228, %v732
        %v734 = vand.u32 %v733, 4294901760
        %735 = vmatpush1.msra.mxu0 %v734
        %736 = vmatprep.subr.mxu0 0.0
        %v737 = vand.u32 %v227, 4294901760
        %v738 = vsub.f32 %v227, %v737
        %v739 = vand.u32 %v738, 4294901760
        %740 = vmatpush1.msra.mxu0 %v739
        %741 = vmatprep.subr.mxu0 0.0
        %v742 = vand.u32 %v226, 4294901760
        %v743 = vsub.f32 %v226, %v742
        %v744 = vand.u32 %v743, 4294901760
        %745 = vmatpush1.msra.mxu0 %v744
        %746 = vmatprep.subr.mxu0 0.0
        %v747 = vand.u32 %v225, 4294901760
        %v748 = vsub.f32 %v225, %v747
        %v749 = vand.u32 %v748, 4294901760
        %750 = vmatpush1.msra.mxu0 %v749
        %751 = vmatprep.subr.mxu0 0.0
        %v752 = vand.u32 %v224, 4294901760
        %v753 = vsub.f32 %v224, %v752
        %v754 = vand.u32 %v753, 4294901760
        %755 = vmatpush1.msra.mxu0 %v754
        %756 = vmatprep.subr.mxu0 0.0
        %v757 = vand.u32 %v223, 4294901760
        %v758 = vsub.f32 %v223, %v757
        %v759 = vand.u32 %v758, 4294901760
        %760 = vmatpush1.msra.mxu0 %v759
        %761 = vmatprep.subr.mxu0 0.0
        %v762 = vand.u32 %v222, 4294901760
        %v763 = vsub.f32 %v222, %v762
        %v764 = vand.u32 %v763, 4294901760
        %765 = vmatpush1.msra.mxu0 %v764
        %766 = vmatprep.subr.mxu0 0.0
        %v767 = vand.u32 %v221, 4294901760
        %v768 = vsub.f32 %v221, %v767
        %v769 = vand.u32 %v768, 4294901760
        %770 = vmatpush1.msra.mxu0 %v769
        %771 = vmatprep.subr.mxu0 0.0
        %v772 = vand.u32 %v220, 4294901760
        %v773 = vsub.f32 %v220, %v772
        %v774 = vand.u32 %v773, 4294901760
        %775 = vmatpush1.msra.mxu0 %v774
        %776 = vmatprep.subr.mxu0 0.0
        %v777 = vand.u32 %v219, 4294901760
        %v778 = vsub.f32 %v219, %v777
        %v779 = vand.u32 %v778, 4294901760
        %780 = vmatpush1.msra.mxu0 %v779
        %781 = vmatprep.subr.mxu0 0.0
        %782 = vmatpush2.msra.mxu0 0.0
        %783 = vmatprep.subr.mxu0 0.0
        %784 = vmatpush2.msra.mxu0 0.0
        %785 = vmatprep.subr.mxu0 0.0
        %786 = vmatpush2.msra.mxu0 0.0
        %787 = vmatprep.subr.mxu0 0.0
        %788 = vmatpush2.msra.mxu0 0.0
        %789 = vmatprep.subr.mxu0 0.0
        %790 = vmatpush2.msra.mxu0 0.0
        %791 = vmatprep.subr.mxu0 0.0
        %792 = vmatpush2.msra.mxu0 0.0
        %793 = vmatprep.subr.mxu0 0.0
        %794 = vmatpush2.msra.mxu0 0.0
        %795 = vmatprep.subr.mxu0 0.0
        %796 = vmatpush2.msra.mxu0 0.0
        %797 = vmatprep.subr.mxu0 0.0
        %798 = vmatpush2.msra.mxu0 0.0
        %799 = vmatprep.subr.mxu0 0.0
        %800 = vmatpush2.msra.mxu0 0.0
        %801 = vmatprep.subr.mxu0 0.0
        %802 = vmatpush2.msra.mxu0 0.0
        %803 = vmatprep.subr.mxu0 0.0
        %804 = vmatpush2.msra.mxu0 0.0
        %805 = vmatprep.subr.mxu0 0.0
        %806 = vmatpush2.msra.mxu0 0.0
        %807 = vmatprep.subr.mxu0 0.0
        %808 = vmatpush2.msra.mxu0 0.0
        %809 = vmatprep.subr.mxu0 0.0
        %810 = vmatpush2.msra.mxu0 0.0
        %811 = vmatprep.subr.mxu0 0.0
        %812 = vmatpush2.msra.mxu0 0.0
        %813 = vmatprep.mubr.f32.mxu0 0.0
        %v814 = vand.u32 %v217, 4294901760
        %815 = vmatmul.mubr.f32.gmra.mxu0 %v814
        %v816 = vpop.f32.mrf.mxu0
        %v817 = vadd.f32 %v690, %v816
        %v818 = vpop.f32.mrf.mxu0
        %819 = vmatprep.mubr.f32.mxu0 0.0
        %v820 = vand.u32 %v218, 4294901760
        %821 = vmatmul.mubr.f32.gmra.mxu0 %v820
        %v822 = vpop.f32.mrf.mxu0
        %v823 = vadd.f32 %v698, %v822
        %v824 = vpop.f32.mrf.mxu0
        %825 = vdwg.mxu0
        %826 = vmatprep.subr.mxu0 0.0
        %v827 = vand.u32 %v234, 4294901760
        %828 = vmatpush1.msra.mxu0 %v827
        %829 = vmatprep.subr.mxu0 0.0
        %v830 = vand.u32 %v233, 4294901760
        %831 = vmatpush1.msra.mxu0 %v830
        %832 = vmatprep.subr.mxu0 0.0
        %v833 = vand.u32 %v232, 4294901760
        %834 = vmatpush1.msra.mxu0 %v833
        %835 = vmatprep.subr.mxu0 0.0
        %v836 = vand.u32 %v231, 4294901760
        %837 = vmatpush1.msra.mxu0 %v836
        %838 = vmatprep.subr.mxu0 0.0
        %v839 = vand.u32 %v230, 4294901760
        %840 = vmatpush1.msra.mxu0 %v839
        %841 = vmatprep.subr.mxu0 0.0
        %v842 = vand.u32 %v229, 4294901760
        %843 = vmatpush1.msra.mxu0 %v842
        %844 = vmatprep.subr.mxu0 0.0
        %v845 = vand.u32 %v228, 4294901760
        %846 = vmatpush1.msra.mxu0 %v845
        %847 = vmatprep.subr.mxu0 0.0
        %v848 = vand.u32 %v227, 4294901760
        %849 = vmatpush1.msra.mxu0 %v848
        %850 = vmatprep.subr.mxu0 0.0
        %v851 = vand.u32 %v226, 4294901760
        %852 = vmatpush1.msra.mxu0 %v851
        %853 = vmatprep.subr.mxu0 0.0
        %v854 = vand.u32 %v225, 4294901760
        %855 = vmatpush1.msra.mxu0 %v854
        %856 = vmatprep.subr.mxu0 0.0
        %v857 = vand.u32 %v224, 4294901760
        %858 = vmatpush1.msra.mxu0 %v857
        %859 = vmatprep.subr.mxu0 0.0
        %v860 = vand.u32 %v223, 4294901760
        %861 = vmatpush1.msra.mxu0 %v860
        %862 = vmatprep.subr.mxu0 0.0
        %v863 = vand.u32 %v222, 4294901760
        %864 = vmatpush1.msra.mxu0 %v863
        %865 = vmatprep.subr.mxu0 0.0
        %v866 = vand.u32 %v221, 4294901760
        %867 = vmatpush1.msra.mxu0 %v866
        %868 = vmatprep.subr.mxu0 0.0
        %v869 = vand.u32 %v220, 4294901760
        %870 = vmatpush1.msra.mxu0 %v869
        %871 = vmatprep.subr.mxu0 0.0
        %v872 = vand.u32 %v219, 4294901760
        %873 = vmatpush1.msra.mxu0 %v872
        %874 = vmatprep.subr.mxu0 0.0
        %875 = vmatpush2.msra.mxu0 0.0
        %876 = vmatprep.subr.mxu0 0.0
        %877 = vmatpush2.msra.mxu0 0.0
        %878 = vmatprep.subr.mxu0 0.0
        %879 = vmatpush2.msra.mxu0 0.0
        %880 = vmatprep.subr.mxu0 0.0
        %881 = vmatpush2.msra.mxu0 0.0
        %882 = vmatprep.subr.mxu0 0.0
        %883 = vmatpush2.msra.mxu0 0.0
        %884 = vmatprep.subr.mxu0 0.0
        %885 = vmatpush2.msra.mxu0 0.0
        %886 = vmatprep.subr.mxu0 0.0
        %887 = vmatpush2.msra.mxu0 0.0
        %888 = vmatprep.subr.mxu0 0.0
        %889 = vmatpush2.msra.mxu0 0.0
        %890 = vmatprep.subr.mxu0 0.0
        %891 = vmatpush2.msra.mxu0 0.0
        %892 = vmatprep.subr.mxu0 0.0
        %893 = vmatpush2.msra.mxu0 0.0
        %894 = vmatprep.subr.mxu0 0.0
        %895 = vmatpush2.msra.mxu0 0.0
        %896 = vmatprep.subr.mxu0 0.0
        %897 = vmatpush2.msra.mxu0 0.0
        %898 = vmatprep.subr.mxu0 0.0
        %899 = vmatpush2.msra.mxu0 0.0
        %900 = vmatprep.subr.mxu0 0.0
        %901 = vmatpush2.msra.mxu0 0.0
        %902 = vmatprep.subr.mxu0 0.0
        %903 = vmatpush2.msra.mxu0 0.0
        %904 = vmatprep.subr.mxu0 0.0
        %905 = vmatpush2.msra.mxu0 0.0
        %906 = vmatprep.mubr.f32.mxu0 0.0
        %v907 = vand.u32 %v217, 4294901760
        %908 = vmatmul.mubr.f32.gmra.mxu0 %v907
        %v909 = vpop.f32.mrf.mxu0
        %v910 = vadd.f32 %v817, %v909
        %v911 = vpop.f32.mrf.mxu0
        %912 = vmatprep.mubr.f32.mxu0 0.0
        %v913 = vand.u32 %v218, 4294901760
        %914 = vmatmul.mubr.f32.gmra.mxu0 %v913
        %v915 = vpop.f32.mrf.mxu0
        %v916 = vadd.f32 %v823, %v915
        %v917 = vpop.f32.mrf.mxu0
        %918 = vdwg.mxu0
        %v919 = vlaneseq
        %v920 = vshrl.u32 %v919, 7
        %v921 = vadd.s32 %v920, 8
        %v922 = vadd.s32 %v920, 16
        %v923 = vadd.s32 %v920, 24
        %v924 = vlaneseq
        %v925 = vshrl.u32 %v924, 7
        %v926 = vsub.s32 0, %v925
        %v927 = vrot.slane %v215, %v926
        %v928 = vlaneseq
        %v929 = vshrl.u32 %v928, 7
        %v930 = vsub.s32 1, %v929
        %v931 = vrot.slane %v215, %v930
        %v932 = vlaneseq
        %v933 = vshrl.u32 %v932, 7
        %v934 = vsub.s32 2, %v933
        %v935 = vrot.slane %v215, %v934
        %v936 = vlaneseq
        %v937 = vshrl.u32 %v936, 7
        %v938 = vsub.s32 3, %v937
        %v939 = vrot.slane %v215, %v938
        %vm940 = vcmp.eq.s32.totalorder %v920, %v927
        %vm941 = vcmp.eq.s32.totalorder %v920, %v931
        %vm942 = vcmp.eq.s32.totalorder %v920, %v935
        %vm943 = vcmp.eq.s32.totalorder %v920, %v939
        %vm944 = vcmp.eq.s32.totalorder %v921, %v927
        %vm945 = vcmp.eq.s32.totalorder %v921, %v931
        %vm946 = vcmp.eq.s32.totalorder %v921, %v935
        %vm947 = vcmp.eq.s32.totalorder %v921, %v939
        %vm948 = vcmp.eq.s32.totalorder %v922, %v927
        %vm949 = vcmp.eq.s32.totalorder %v922, %v931
        %vm950 = vcmp.eq.s32.totalorder %v922, %v935
        %vm951 = vcmp.eq.s32.totalorder %v922, %v939
        %vm952 = vcmp.eq.s32.totalorder %v923, %v927
        %vm953 = vcmp.eq.s32.totalorder %v923, %v931
        %vm954 = vcmp.eq.s32.totalorder %v923, %v935
        %vm955 = vcmp.eq.s32.totalorder %v923, %v939
        %v956 = vsel %vm940, 1, 0
        %v957 = vsel %vm941, 1, 0
        %v958 = vsel %vm942, 1, 0
        %v959 = vsel %vm943, 1, 0
        %v960 = vsel %vm944, 1, 0
        %v961 = vsel %vm945, 1, 0
        %v962 = vsel %vm946, 1, 0
        %v963 = vsel %vm947, 1, 0
        %v964 = vsel %vm948, 1, 0
        %v965 = vsel %vm949, 1, 0
        %v966 = vsel %vm950, 1, 0
        %v967 = vsel %vm951, 1, 0
        %v968 = vsel %vm952, 1, 0
        %v969 = vsel %vm953, 1, 0
        %v970 = vsel %vm954, 1, 0
        %v971 = vsel %vm955, 1, 0
        %v972 = vcvt.s32.f32 %v956
        %v973 = vcvt.s32.f32 %v957
        %v974 = vcvt.s32.f32 %v958
        %v975 = vcvt.s32.f32 %v959
        %v976 = vcvt.s32.f32 %v960
        %v977 = vcvt.s32.f32 %v961
        %v978 = vcvt.s32.f32 %v962
        %v979 = vcvt.s32.f32 %v963
        %v980 = vcvt.s32.f32 %v964
        %v981 = vcvt.s32.f32 %v965
        %v982 = vcvt.s32.f32 %v966
        %v983 = vcvt.s32.f32 %v967
        %v984 = vcvt.s32.f32 %v968
        %v985 = vcvt.s32.f32 %v969
        %v986 = vcvt.s32.f32 %v970
        %v987 = vcvt.s32.f32 %v971
        %vm988 = vcmask 261120
        %v990 = vsel %vm988, %v910, 0
        %v993 = vsel %vm988, %v916, 0
        %995 = vmatprep.subr.mxu0 0.0
        %996 = vmatpush1.msra.mxu0 0.0
        %997 = vmatprep.subr.mxu0 0.0
        %998 = vmatpush1.msra.mxu0 0.0
        %999 = vmatprep.subr.mxu0 0.0
        %1000 = vmatpush1.msra.mxu0 0.0
        %1001 = vmatprep.subr.mxu0 0.0
        %1002 = vmatpush1.msra.mxu0 0.0
        %1003 = vmatprep.subr.mxu0 0.0
        %1004 = vmatpush1.msra.mxu0 0.0
        %1005 = vmatprep.subr.mxu0 0.0
        %1006 = vmatpush1.msra.mxu0 0.0
        %1007 = vmatprep.subr.mxu0 0.0
        %1008 = vmatpush1.msra.mxu0 0.0
        %1009 = vmatprep.subr.mxu0 0.0
        %1010 = vmatpush1.msra.mxu0 0.0
        %1011 = vmatprep.subr.mxu0 0.0
        %1012 = vmatpush1.msra.mxu0 0.0
        %1013 = vmatprep.subr.mxu0 0.0
        %1014 = vmatpush1.msra.mxu0 0.0
        %1015 = vmatprep.subr.mxu0 0.0
        %1016 = vmatpush1.msra.mxu0 0.0
        %1017 = vmatprep.subr.mxu0 0.0
        %1018 = vmatpush1.msra.mxu0 0.0
        %v1019 = vand.u32 %v985, 4294901760
        %1020 = vmatprep.subr.mxu0 %v1019
        %v1021 = vand.u32 %v984, 4294901760
        %1022 = vmatpush1.msra.mxu0 %v1021
        %v1023 = vand.u32 %v981, 4294901760
        %1024 = vmatprep.subr.mxu0 %v1023
        %v1025 = vand.u32 %v980, 4294901760
        %1026 = vmatpush1.msra.mxu0 %v1025
        %v1027 = vand.u32 %v977, 4294901760
        %1028 = vmatprep.subr.mxu0 %v1027
        %v1029 = vand.u32 %v976, 4294901760
        %1030 = vmatpush1.msra.mxu0 %v1029
        %v1031 = vand.u32 %v973, 4294901760
        %1032 = vmatprep.subr.mxu0 %v1031
        %v1033 = vand.u32 %v972, 4294901760
        %1034 = vmatpush1.msra.mxu0 %v1033
        %1035 = vmatprep.subr.mxu0 0.0
        %1036 = vmatpush2.msra.mxu0 0.0
        %1037 = vmatprep.subr.mxu0 0.0
        %1038 = vmatpush2.msra.mxu0 0.0
        %1039 = vmatprep.subr.mxu0 0.0
        %1040 = vmatpush2.msra.mxu0 0.0
        %1041 = vmatprep.subr.mxu0 0.0
        %1042 = vmatpush2.msra.mxu0 0.0
        %1043 = vmatprep.subr.mxu0 0.0
        %1044 = vmatpush2.msra.mxu0 0.0
        %1045 = vmatprep.subr.mxu0 0.0
        %1046 = vmatpush2.msra.mxu0 0.0
        %1047 = vmatprep.subr.mxu0 0.0
        %1048 = vmatpush2.msra.mxu0 0.0
        %1049 = vmatprep.subr.mxu0 0.0
        %1050 = vmatpush2.msra.mxu0 0.0
        %1051 = vmatprep.subr.mxu0 0.0
        %1052 = vmatpush2.msra.mxu0 0.0
        %1053 = vmatprep.subr.mxu0 0.0
        %1054 = vmatpush2.msra.mxu0 0.0
        %1055 = vmatprep.subr.mxu0 0.0
        %1056 = vmatpush2.msra.mxu0 0.0
        %1057 = vmatprep.subr.mxu0 0.0
        %1058 = vmatpush2.msra.mxu0 0.0
        %1059 = vmatprep.subr.mxu0 0.0
        %1060 = vmatpush2.msra.mxu0 0.0
        %1061 = vmatprep.subr.mxu0 0.0
        %1062 = vmatpush2.msra.mxu0 0.0
        %1063 = vmatprep.subr.mxu0 0.0
        %1064 = vmatpush2.msra.mxu0 0.0
        %1065 = vmatprep.subr.mxu0 0.0
        %1066 = vmatpush2.msra.mxu0 0.0
        %1067 = vmatprep.mubr.f32.mxu0 0.0
        %v1068 = vand.u32 %v990, 4294901760
        %v1069 = vsub.f32 %v990, %v1068
        %v1070 = vand.u32 %v1069, 4294901760
        %v1071 = vsub.f32 %v1069, %v1070
        %v1072 = vand.u32 %v1071, 4294901760
        %1073 = vmatmul.mubr.f32.gmra.mxu0 %v1072
        %v1074 = vpop.f32.mrf.mxu0
        %v1075 = vadd.f32 0.0, %v1074
        %v1076 = vpop.f32.mrf.mxu0
        %v1077 = vadd.f32 0.0, %v1076
        %1078 = vmatprep.mubr.f32.mxu0 0.0
        %v1079 = vand.u32 %v993, 4294901760
        %v1080 = vsub.f32 %v993, %v1079
        %v1081 = vand.u32 %v1080, 4294901760
        %v1082 = vsub.f32 %v1080, %v1081
        %v1083 = vand.u32 %v1082, 4294901760
        %1084 = vmatmul.mubr.f32.gmra.mxu0 %v1083
        %v1085 = vpop.f32.mrf.mxu0
        %v1086 = vadd.f32 0.0, %v1085
        %v1087 = vpop.f32.mrf.mxu0
        %v1088 = vadd.f32 0.0, %v1087
        %1089 = vdwg.mxu0
        %1090 = vmatprep.subr.mxu0 0.0
        %1091 = vmatpush1.msra.mxu0 0.0
        %1092 = vmatprep.subr.mxu0 0.0
        %1093 = vmatpush1.msra.mxu0 0.0
        %1094 = vmatprep.subr.mxu0 0.0
        %1095 = vmatpush1.msra.mxu0 0.0
        %1096 = vmatprep.subr.mxu0 0.0
        %1097 = vmatpush1.msra.mxu0 0.0
        %1098 = vmatprep.subr.mxu0 0.0
        %1099 = vmatpush1.msra.mxu0 0.0
        %1100 = vmatprep.subr.mxu0 0.0
        %1101 = vmatpush1.msra.mxu0 0.0
        %1102 = vmatprep.subr.mxu0 0.0
        %1103 = vmatpush1.msra.mxu0 0.0
        %1104 = vmatprep.subr.mxu0 0.0
        %1105 = vmatpush1.msra.mxu0 0.0
        %1106 = vmatprep.subr.mxu0 0.0
        %1107 = vmatpush1.msra.mxu0 0.0
        %1108 = vmatprep.subr.mxu0 0.0
        %1109 = vmatpush1.msra.mxu0 0.0
        %1110 = vmatprep.subr.mxu0 0.0
        %1111 = vmatpush1.msra.mxu0 0.0
        %1112 = vmatprep.subr.mxu0 0.0
        %1113 = vmatpush1.msra.mxu0 0.0
        %v1114 = vand.u32 %v985, 4294901760
        %v1115 = vsub.f32 %v985, %v1114
        %v1116 = vand.u32 %v1115, 4294901760
        %v1117 = vsub.f32 %v1115, %v1116
        %v1118 = vand.u32 %v1117, 4294901760
        %1119 = vmatprep.subr.mxu0 %v1118
        %v1120 = vand.u32 %v984, 4294901760
        %v1121 = vsub.f32 %v984, %v1120
        %v1122 = vand.u32 %v1121, 4294901760
        %v1123 = vsub.f32 %v1121, %v1122
        %v1124 = vand.u32 %v1123, 4294901760
        %1125 = vmatpush1.msra.mxu0 %v1124
        %v1126 = vand.u32 %v981, 4294901760
        %v1127 = vsub.f32 %v981, %v1126
        %v1128 = vand.u32 %v1127, 4294901760
        %v1129 = vsub.f32 %v1127, %v1128
        %v1130 = vand.u32 %v1129, 4294901760
        %1131 = vmatprep.subr.mxu0 %v1130
        %v1132 = vand.u32 %v980, 4294901760
        %v1133 = vsub.f32 %v980, %v1132
        %v1134 = vand.u32 %v1133, 4294901760
        %v1135 = vsub.f32 %v1133, %v1134
        %v1136 = vand.u32 %v1135, 4294901760
        %1137 = vmatpush1.msra.mxu0 %v1136
        %v1138 = vand.u32 %v977, 4294901760
        %v1139 = vsub.f32 %v977, %v1138
        %v1140 = vand.u32 %v1139, 4294901760
        %v1141 = vsub.f32 %v1139, %v1140
        %v1142 = vand.u32 %v1141, 4294901760
        %1143 = vmatprep.subr.mxu0 %v1142
        %v1144 = vand.u32 %v976, 4294901760
        %v1145 = vsub.f32 %v976, %v1144
        %v1146 = vand.u32 %v1145, 4294901760
        %v1147 = vsub.f32 %v1145, %v1146
        %v1148 = vand.u32 %v1147, 4294901760
        %1149 = vmatpush1.msra.mxu0 %v1148
        %v1150 = vand.u32 %v973, 4294901760
        %v1151 = vsub.f32 %v973, %v1150
        %v1152 = vand.u32 %v1151, 4294901760
        %v1153 = vsub.f32 %v1151, %v1152
        %v1154 = vand.u32 %v1153, 4294901760
        %1155 = vmatprep.subr.mxu0 %v1154
        %v1156 = vand.u32 %v972, 4294901760
        %v1157 = vsub.f32 %v972, %v1156
        %v1158 = vand.u32 %v1157, 4294901760
        %v1159 = vsub.f32 %v1157, %v1158
        %v1160 = vand.u32 %v1159, 4294901760
        %1161 = vmatpush1.msra.mxu0 %v1160
        %1162 = vmatprep.subr.mxu0 0.0
        %1163 = vmatpush2.msra.mxu0 0.0
        %1164 = vmatprep.subr.mxu0 0.0
        %1165 = vmatpush2.msra.mxu0 0.0
        %1166 = vmatprep.subr.mxu0 0.0
        %1167 = vmatpush2.msra.mxu0 0.0
        %1168 = vmatprep.subr.mxu0 0.0
        %1169 = vmatpush2.msra.mxu0 0.0
        %1170 = vmatprep.subr.mxu0 0.0
        %1171 = vmatpush2.msra.mxu0 0.0
        %1172 = vmatprep.subr.mxu0 0.0
        %1173 = vmatpush2.msra.mxu0 0.0
        %1174 = vmatprep.subr.mxu0 0.0
        %1175 = vmatpush2.msra.mxu0 0.0
        %1176 = vmatprep.subr.mxu0 0.0
        %1177 = vmatpush2.msra.mxu0 0.0
        %1178 = vmatprep.subr.mxu0 0.0
        %1179 = vmatpush2.msra.mxu0 0.0
        %1180 = vmatprep.subr.mxu0 0.0
        %1181 = vmatpush2.msra.mxu0 0.0
        %1182 = vmatprep.subr.mxu0 0.0
        %1183 = vmatpush2.msra.mxu0 0.0
        %1184 = vmatprep.subr.mxu0 0.0
        %1185 = vmatpush2.msra.mxu0 0.0
        %1186 = vmatprep.subr.mxu0 0.0
        %1187 = vmatpush2.msra.mxu0 0.0
        %1188 = vmatprep.subr.mxu0 0.0
        %1189 = vmatpush2.msra.mxu0 0.0
        %1190 = vmatprep.subr.mxu0 0.0
        %1191 = vmatpush2.msra.mxu0 0.0
        %1192 = vmatprep.subr.mxu0 0.0
        %1193 = vmatpush2.msra.mxu0 0.0
        %1194 = vmatprep.mubr.f32.mxu0 0.0
        %v1195 = vand.u32 %v990, 4294901760
        %1196 = vmatmul.mubr.f32.gmra.mxu0 %v1195
        %v1197 = vpop.f32.mrf.mxu0
        %v1198 = vadd.f32 %v1075, %v1197
        %v1199 = vpop.f32.mrf.mxu0
        %v1200 = vadd.f32 %v1077, %v1199
        %1201 = vmatprep.mubr.f32.mxu0 0.0
        %v1202 = vand.u32 %v993, 4294901760
        %1203 = vmatmul.mubr.f32.gmra.mxu0 %v1202
        %v1204 = vpop.f32.mrf.mxu0
        %v1205 = vadd.f32 %v1086, %v1204
        %v1206 = vpop.f32.mrf.mxu0
        %v1207 = vadd.f32 %v1088, %v1206
        %1208 = vdwg.mxu0
        %1209 = vmatprep.subr.mxu0 0.0
        %1210 = vmatpush1.msra.mxu0 0.0
        %1211 = vmatprep.subr.mxu0 0.0
        %1212 = vmatpush1.msra.mxu0 0.0
        %1213 = vmatprep.subr.mxu0 0.0
        %1214 = vmatpush1.msra.mxu0 0.0
        %1215 = vmatprep.subr.mxu0 0.0
        %1216 = vmatpush1.msra.mxu0 0.0
        %1217 = vmatprep.subr.mxu0 0.0
        %1218 = vmatpush1.msra.mxu0 0.0
        %1219 = vmatprep.subr.mxu0 0.0
        %1220 = vmatpush1.msra.mxu0 0.0
        %1221 = vmatprep.subr.mxu0 0.0
        %1222 = vmatpush1.msra.mxu0 0.0
        %1223 = vmatprep.subr.mxu0 0.0
        %1224 = vmatpush1.msra.mxu0 0.0
        %1225 = vmatprep.subr.mxu0 0.0
        %1226 = vmatpush1.msra.mxu0 0.0
        %1227 = vmatprep.subr.mxu0 0.0
        %1228 = vmatpush1.msra.mxu0 0.0
        %1229 = vmatprep.subr.mxu0 0.0
        %1230 = vmatpush1.msra.mxu0 0.0
        %1231 = vmatprep.subr.mxu0 0.0
        %1232 = vmatpush1.msra.mxu0 0.0
        %v1233 = vand.u32 %v985, 4294901760
        %v1234 = vsub.f32 %v985, %v1233
        %1235 = vmatprep.subr.mxu0 %v1234
        %v1236 = vand.u32 %v984, 4294901760
        %v1237 = vsub.f32 %v984, %v1236
        %1238 = vmatpush1.msra.mxu0 %v1237
        %v1239 = vand.u32 %v981, 4294901760
        %v1240 = vsub.f32 %v981, %v1239
        %1241 = vmatprep.subr.mxu0 %v1240
        %v1242 = vand.u32 %v980, 4294901760
        %v1243 = vsub.f32 %v980, %v1242
        %1244 = vmatpush1.msra.mxu0 %v1243
        %v1245 = vand.u32 %v977, 4294901760
        %v1246 = vsub.f32 %v977, %v1245
        %1247 = vmatprep.subr.mxu0 %v1246
        %v1248 = vand.u32 %v976, 4294901760
        %v1249 = vsub.f32 %v976, %v1248
        %1250 = vmatpush1.msra.mxu0 %v1249
        %v1251 = vand.u32 %v973, 4294901760
        %v1252 = vsub.f32 %v973, %v1251
        %1253 = vmatprep.subr.mxu0 %v1252
        %v1254 = vand.u32 %v972, 4294901760
        %v1255 = vsub.f32 %v972, %v1254
        %1256 = vmatpush1.msra.mxu0 %v1255
        %1257 = vmatprep.subr.mxu0 0.0
        %1258 = vmatpush2.msra.mxu0 0.0
        %1259 = vmatprep.subr.mxu0 0.0
        %1260 = vmatpush2.msra.mxu0 0.0
        %1261 = vmatprep.subr.mxu0 0.0
        %1262 = vmatpush2.msra.mxu0 0.0
        %1263 = vmatprep.subr.mxu0 0.0
        %1264 = vmatpush2.msra.mxu0 0.0
        %1265 = vmatprep.subr.mxu0 0.0
        %1266 = vmatpush2.msra.mxu0 0.0
        %1267 = vmatprep.subr.mxu0 0.0
        %1268 = vmatpush2.msra.mxu0 0.0
        %1269 = vmatprep.subr.mxu0 0.0
        %1270 = vmatpush2.msra.mxu0 0.0
        %1271 = vmatprep.subr.mxu0 0.0
        %1272 = vmatpush2.msra.mxu0 0.0
        %1273 = vmatprep.subr.mxu0 0.0
        %1274 = vmatpush2.msra.mxu0 0.0
        %1275 = vmatprep.subr.mxu0 0.0
        %1276 = vmatpush2.msra.mxu0 0.0
        %1277 = vmatprep.subr.mxu0 0.0
        %1278 = vmatpush2.msra.mxu0 0.0
        %1279 = vmatprep.subr.mxu0 0.0
        %1280 = vmatpush2.msra.mxu0 0.0
        %1281 = vmatprep.subr.mxu0 0.0
        %1282 = vmatpush2.msra.mxu0 0.0
        %1283 = vmatprep.subr.mxu0 0.0
        %1284 = vmatpush2.msra.mxu0 0.0
        %1285 = vmatprep.subr.mxu0 0.0
        %1286 = vmatpush2.msra.mxu0 0.0
        %1287 = vmatprep.subr.mxu0 0.0
        %1288 = vmatpush2.msra.mxu0 0.0
        %1289 = vmatprep.mubr.f32.mxu0 0.0
        %v1290 = vand.u32 %v990, 4294901760
        %v1291 = vsub.f32 %v990, %v1290
        %1292 = vmatmul.mubr.f32.gmra.mxu0 %v1291
        %v1293 = vpop.f32.mrf.mxu0
        %v1294 = vadd.f32 %v1198, %v1293
        %v1295 = vpop.f32.mrf.mxu0
        %v1296 = vadd.f32 %v1200, %v1295
        %1297 = vmatprep.mubr.f32.mxu0 0.0
        %v1298 = vand.u32 %v993, 4294901760
        %v1299 = vsub.f32 %v993, %v1298
        %1300 = vmatmul.mubr.f32.gmra.mxu0 %v1299
        %v1301 = vpop.f32.mrf.mxu0
        %v1302 = vadd.f32 %v1205, %v1301
        %v1303 = vpop.f32.mrf.mxu0
        %v1304 = vadd.f32 %v1207, %v1303
        %1305 = vdwg.mxu0
        %1306 = vmatprep.subr.mxu0 0.0
        %1307 = vmatpush1.msra.mxu0 0.0
        %1308 = vmatprep.subr.mxu0 0.0
        %1309 = vmatpush1.msra.mxu0 0.0
        %1310 = vmatprep.subr.mxu0 0.0
        %1311 = vmatpush1.msra.mxu0 0.0
        %1312 = vmatprep.subr.mxu0 0.0
        %1313 = vmatpush1.msra.mxu0 0.0
        %1314 = vmatprep.subr.mxu0 0.0
        %1315 = vmatpush1.msra.mxu0 0.0
        %1316 = vmatprep.subr.mxu0 0.0
        %1317 = vmatpush1.msra.mxu0 0.0
        %1318 = vmatprep.subr.mxu0 0.0
        %1319 = vmatpush1.msra.mxu0 0.0
        %1320 = vmatprep.subr.mxu0 0.0
        %1321 = vmatpush1.msra.mxu0 0.0
        %1322 = vmatprep.subr.mxu0 0.0
        %1323 = vmatpush1.msra.mxu0 0.0
        %1324 = vmatprep.subr.mxu0 0.0
        %1325 = vmatpush1.msra.mxu0 0.0
        %1326 = vmatprep.subr.mxu0 0.0
        %1327 = vmatpush1.msra.mxu0 0.0
        %1328 = vmatprep.subr.mxu0 0.0
        %1329 = vmatpush1.msra.mxu0 0.0
        %v1330 = vand.u32 %v985, 4294901760
        %1331 = vmatprep.subr.mxu0 %v1330
        %v1332 = vand.u32 %v984, 4294901760
        %1333 = vmatpush1.msra.mxu0 %v1332
        %v1334 = vand.u32 %v981, 4294901760
        %1335 = vmatprep.subr.mxu0 %v1334
        %v1336 = vand.u32 %v980, 4294901760
        %1337 = vmatpush1.msra.mxu0 %v1336
        %v1338 = vand.u32 %v977, 4294901760
        %1339 = vmatprep.subr.mxu0 %v1338
        %v1340 = vand.u32 %v976, 4294901760
        %1341 = vmatpush1.msra.mxu0 %v1340
        %v1342 = vand.u32 %v973, 4294901760
        %1343 = vmatprep.subr.mxu0 %v1342
        %v1344 = vand.u32 %v972, 4294901760
        %1345 = vmatpush1.msra.mxu0 %v1344
        %1346 = vmatprep.subr.mxu0 0.0
        %1347 = vmatpush2.msra.mxu0 0.0
        %1348 = vmatprep.subr.mxu0 0.0
        %1349 = vmatpush2.msra.mxu0 0.0
        %1350 = vmatprep.subr.mxu0 0.0
        %1351 = vmatpush2.msra.mxu0 0.0
        %1352 = vmatprep.subr.mxu0 0.0
        %1353 = vmatpush2.msra.mxu0 0.0
        %1354 = vmatprep.subr.mxu0 0.0
        %1355 = vmatpush2.msra.mxu0 0.0
        %1356 = vmatprep.subr.mxu0 0.0
        %1357 = vmatpush2.msra.mxu0 0.0
        %1358 = vmatprep.subr.mxu0 0.0
        %1359 = vmatpush2.msra.mxu0 0.0
        %1360 = vmatprep.subr.mxu0 0.0
        %1361 = vmatpush2.msra.mxu0 0.0
        %1362 = vmatprep.subr.mxu0 0.0
        %1363 = vmatpush2.msra.mxu0 0.0
        %1364 = vmatprep.subr.mxu0 0.0
        %1365 = vmatpush2.msra.mxu0 0.0
        %1366 = vmatprep.subr.mxu0 0.0
        %1367 = vmatpush2.msra.mxu0 0.0
        %1368 = vmatprep.subr.mxu0 0.0
        %1369 = vmatpush2.msra.mxu0 0.0
        %1370 = vmatprep.subr.mxu0 0.0
        %1371 = vmatpush2.msra.mxu0 0.0
        %1372 = vmatprep.subr.mxu0 0.0
        %1373 = vmatpush2.msra.mxu0 0.0
        %1374 = vmatprep.subr.mxu0 0.0
        %1375 = vmatpush2.msra.mxu0 0.0
        %1376 = vmatprep.subr.mxu0 0.0
        %1377 = vmatpush2.msra.mxu0 0.0
        %1378 = vmatprep.mubr.f32.mxu0 0.0
        %v1379 = vand.u32 %v990, 4294901760
        %v1380 = vsub.f32 %v990, %v1379
        %v1381 = vand.u32 %v1380, 4294901760
        %1382 = vmatmul.mubr.f32.gmra.mxu0 %v1381
        %v1383 = vpop.f32.mrf.mxu0
        %v1384 = vadd.f32 %v1294, %v1383
        %v1385 = vpop.f32.mrf.mxu0
        %v1386 = vadd.f32 %v1296, %v1385
        %1387 = vmatprep.mubr.f32.mxu0 0.0
        %v1388 = vand.u32 %v993, 4294901760
        %v1389 = vsub.f32 %v993, %v1388
        %v1390 = vand.u32 %v1389, 4294901760
        %1391 = vmatmul.mubr.f32.gmra.mxu0 %v1390
        %v1392 = vpop.f32.mrf.mxu0
        %v1393 = vadd.f32 %v1302, %v1392
        %v1394 = vpop.f32.mrf.mxu0
        %v1395 = vadd.f32 %v1304, %v1394
        %1396 = vdwg.mxu0
        %1397 = vmatprep.subr.mxu0 0.0
        %1398 = vmatpush1.msra.mxu0 0.0
        %1399 = vmatprep.subr.mxu0 0.0
        %1400 = vmatpush1.msra.mxu0 0.0
        %1401 = vmatprep.subr.mxu0 0.0
        %1402 = vmatpush1.msra.mxu0 0.0
        %1403 = vmatprep.subr.mxu0 0.0
        %1404 = vmatpush1.msra.mxu0 0.0
        %1405 = vmatprep.subr.mxu0 0.0
        %1406 = vmatpush1.msra.mxu0 0.0
        %1407 = vmatprep.subr.mxu0 0.0
        %1408 = vmatpush1.msra.mxu0 0.0
        %1409 = vmatprep.subr.mxu0 0.0
        %1410 = vmatpush1.msra.mxu0 0.0
        %1411 = vmatprep.subr.mxu0 0.0
        %1412 = vmatpush1.msra.mxu0 0.0
        %1413 = vmatprep.subr.mxu0 0.0
        %1414 = vmatpush1.msra.mxu0 0.0
        %1415 = vmatprep.subr.mxu0 0.0
        %1416 = vmatpush1.msra.mxu0 0.0
        %1417 = vmatprep.subr.mxu0 0.0
        %1418 = vmatpush1.msra.mxu0 0.0
        %1419 = vmatprep.subr.mxu0 0.0
        %1420 = vmatpush1.msra.mxu0 0.0
        %v1421 = vand.u32 %v985, 4294901760
        %v1422 = vsub.f32 %v985, %v1421
        %v1423 = vand.u32 %v1422, 4294901760
        %1424 = vmatprep.subr.mxu0 %v1423
        %v1425 = vand.u32 %v984, 4294901760
        %v1426 = vsub.f32 %v984, %v1425
        %v1427 = vand.u32 %v1426, 4294901760
        %1428 = vmatpush1.msra.mxu0 %v1427
        %v1429 = vand.u32 %v981, 4294901760
        %v1430 = vsub.f32 %v981, %v1429
        %v1431 = vand.u32 %v1430, 4294901760
        %1432 = vmatprep.subr.mxu0 %v1431
        %v1433 = vand.u32 %v980, 4294901760
        %v1434 = vsub.f32 %v980, %v1433
        %v1435 = vand.u32 %v1434, 4294901760
        %1436 = vmatpush1.msra.mxu0 %v1435
        %v1437 = vand.u32 %v977, 4294901760
        %v1438 = vsub.f32 %v977, %v1437
        %v1439 = vand.u32 %v1438, 4294901760
        %1440 = vmatprep.subr.mxu0 %v1439
        %v1441 = vand.u32 %v976, 4294901760
        %v1442 = vsub.f32 %v976, %v1441
        %v1443 = vand.u32 %v1442, 4294901760
        %1444 = vmatpush1.msra.mxu0 %v1443
        %v1445 = vand.u32 %v973, 4294901760
        %v1446 = vsub.f32 %v973, %v1445
        %v1447 = vand.u32 %v1446, 4294901760
        %1448 = vmatprep.subr.mxu0 %v1447
        %v1449 = vand.u32 %v972, 4294901760
        %v1450 = vsub.f32 %v972, %v1449
        %v1451 = vand.u32 %v1450, 4294901760
        %1452 = vmatpush1.msra.mxu0 %v1451
        %1453 = vmatprep.subr.mxu0 0.0
        %1454 = vmatpush2.msra.mxu0 0.0
        %1455 = vmatprep.subr.mxu0 0.0
        %1456 = vmatpush2.msra.mxu0 0.0
        %1457 = vmatprep.subr.mxu0 0.0
        %1458 = vmatpush2.msra.mxu0 0.0
        %1459 = vmatprep.subr.mxu0 0.0
        %1460 = vmatpush2.msra.mxu0 0.0
        %1461 = vmatprep.subr.mxu0 0.0
        %1462 = vmatpush2.msra.mxu0 0.0
        %1463 = vmatprep.subr.mxu0 0.0
        %1464 = vmatpush2.msra.mxu0 0.0
        %1465 = vmatprep.subr.mxu0 0.0
        %1466 = vmatpush2.msra.mxu0 0.0
        %1467 = vmatprep.subr.mxu0 0.0
        %1468 = vmatpush2.msra.mxu0 0.0
        %1469 = vmatprep.subr.mxu0 0.0
        %1470 = vmatpush2.msra.mxu0 0.0
        %1471 = vmatprep.subr.mxu0 0.0
        %1472 = vmatpush2.msra.mxu0 0.0
        %1473 = vmatprep.subr.mxu0 0.0
        %1474 = vmatpush2.msra.mxu0 0.0
        %1475 = vmatprep.subr.mxu0 0.0
        %1476 = vmatpush2.msra.mxu0 0.0
        %1477 = vmatprep.subr.mxu0 0.0
        %1478 = vmatpush2.msra.mxu0 0.0
        %1479 = vmatprep.subr.mxu0 0.0
        %1480 = vmatpush2.msra.mxu0 0.0
        %1481 = vmatprep.subr.mxu0 0.0
        %1482 = vmatpush2.msra.mxu0 0.0
        %1483 = vmatprep.subr.mxu0 0.0
        %1484 = vmatpush2.msra.mxu0 0.0
        %1485 = vmatprep.mubr.f32.mxu0 0.0
        %v1486 = vand.u32 %v990, 4294901760
        %1487 = vmatmul.mubr.f32.gmra.mxu0 %v1486
        %v1488 = vpop.f32.mrf.mxu0
        %v1489 = vadd.f32 %v1384, %v1488
        %v1490 = vpop.f32.mrf.mxu0
        %v1491 = vadd.f32 %v1386, %v1490
        %1492 = vmatprep.mubr.f32.mxu0 0.0
        %v1493 = vand.u32 %v993, 4294901760
        %1494 = vmatmul.mubr.f32.gmra.mxu0 %v1493
        %v1495 = vpop.f32.mrf.mxu0
        %v1496 = vadd.f32 %v1393, %v1495
        %v1497 = vpop.f32.mrf.mxu0
        %v1498 = vadd.f32 %v1395, %v1497
        %1499 = vdwg.mxu0
        %1500 = vmatprep.subr.mxu0 0.0
        %1501 = vmatpush1.msra.mxu0 0.0
        %1502 = vmatprep.subr.mxu0 0.0
        %1503 = vmatpush1.msra.mxu0 0.0
        %1504 = vmatprep.subr.mxu0 0.0
        %1505 = vmatpush1.msra.mxu0 0.0
        %1506 = vmatprep.subr.mxu0 0.0
        %1507 = vmatpush1.msra.mxu0 0.0
        %1508 = vmatprep.subr.mxu0 0.0
        %1509 = vmatpush1.msra.mxu0 0.0
        %1510 = vmatprep.subr.mxu0 0.0
        %1511 = vmatpush1.msra.mxu0 0.0
        %1512 = vmatprep.subr.mxu0 0.0
        %1513 = vmatpush1.msra.mxu0 0.0
        %1514 = vmatprep.subr.mxu0 0.0
        %1515 = vmatpush1.msra.mxu0 0.0
        %1516 = vmatprep.subr.mxu0 0.0
        %1517 = vmatpush1.msra.mxu0 0.0
        %1518 = vmatprep.subr.mxu0 0.0
        %1519 = vmatpush1.msra.mxu0 0.0
        %1520 = vmatprep.subr.mxu0 0.0
        %1521 = vmatpush1.msra.mxu0 0.0
        %1522 = vmatprep.subr.mxu0 0.0
        %1523 = vmatpush1.msra.mxu0 0.0
        %v1524 = vand.u32 %v985, 4294901760
        %1525 = vmatprep.subr.mxu0 %v1524
        %v1526 = vand.u32 %v984, 4294901760
        %1527 = vmatpush1.msra.mxu0 %v1526
        %v1528 = vand.u32 %v981, 4294901760
        %1529 = vmatprep.subr.mxu0 %v1528
        %v1530 = vand.u32 %v980, 4294901760
        %1531 = vmatpush1.msra.mxu0 %v1530
        %v1532 = vand.u32 %v977, 4294901760
        %1533 = vmatprep.subr.mxu0 %v1532
        %v1534 = vand.u32 %v976, 4294901760
        %1535 = vmatpush1.msra.mxu0 %v1534
        %v1536 = vand.u32 %v973, 4294901760
        %1537 = vmatprep.subr.mxu0 %v1536
        %v1538 = vand.u32 %v972, 4294901760
        %1539 = vmatpush1.msra.mxu0 %v1538
        %1540 = vmatprep.subr.mxu0 0.0
        %1541 = vmatpush2.msra.mxu0 0.0
        %1542 = vmatprep.subr.mxu0 0.0
        %1543 = vmatpush2.msra.mxu0 0.0
        %1544 = vmatprep.subr.mxu0 0.0
        %1545 = vmatpush2.msra.mxu0 0.0
        %1546 = vmatprep.subr.mxu0 0.0
        %1547 = vmatpush2.msra.mxu0 0.0
        %1548 = vmatprep.subr.mxu0 0.0
        %1549 = vmatpush2.msra.mxu0 0.0
        %1550 = vmatprep.subr.mxu0 0.0
        %1551 = vmatpush2.msra.mxu0 0.0
        %1552 = vmatprep.subr.mxu0 0.0
        %1553 = vmatpush2.msra.mxu0 0.0
        %1554 = vmatprep.subr.mxu0 0.0
        %1555 = vmatpush2.msra.mxu0 0.0
        %1556 = vmatprep.subr.mxu0 0.0
        %1557 = vmatpush2.msra.mxu0 0.0
        %1558 = vmatprep.subr.mxu0 0.0
        %1559 = vmatpush2.msra.mxu0 0.0
        %1560 = vmatprep.subr.mxu0 0.0
        %1561 = vmatpush2.msra.mxu0 0.0
        %1562 = vmatprep.subr.mxu0 0.0
        %1563 = vmatpush2.msra.mxu0 0.0
        %1564 = vmatprep.subr.mxu0 0.0
        %1565 = vmatpush2.msra.mxu0 0.0
        %1566 = vmatprep.subr.mxu0 0.0
        %1567 = vmatpush2.msra.mxu0 0.0
        %1568 = vmatprep.subr.mxu0 0.0
        %1569 = vmatpush2.msra.mxu0 0.0
        %1570 = vmatprep.subr.mxu0 0.0
        %1571 = vmatpush2.msra.mxu0 0.0
        %1572 = vmatprep.mubr.f32.mxu0 0.0
        %v1573 = vand.u32 %v990, 4294901760
        %1574 = vmatmul.mubr.f32.gmra.mxu0 %v1573
        %v1575 = vpop.f32.mrf.mxu0
        %v1576 = vadd.f32 %v1489, %v1575
        %v1577 = vpop.f32.mrf.mxu0
        %v1578 = vadd.f32 %v1491, %v1577
        %1579 = vmatprep.mubr.f32.mxu0 0.0
        %v1580 = vand.u32 %v993, 4294901760
        %1581 = vmatmul.mubr.f32.gmra.mxu0 %v1580
        %v1582 = vpop.f32.mrf.mxu0
        %v1583 = vadd.f32 %v1496, %v1582
        %v1584 = vpop.f32.mrf.mxu0
        %v1585 = vadd.f32 %v1498, %v1584
        %1586 = vdwg.mxu0
        %1587 = vmatprep.subr.mxu0 0.0
        %1588 = vmatpush1.msra.mxu0 0.0
        %1589 = vmatprep.subr.mxu0 0.0
        %1590 = vmatpush1.msra.mxu0 0.0
        %1591 = vmatprep.subr.mxu0 0.0
        %1592 = vmatpush1.msra.mxu0 0.0
        %1593 = vmatprep.subr.mxu0 0.0
        %1594 = vmatpush1.msra.mxu0 0.0
        %1595 = vmatprep.subr.mxu0 0.0
        %1596 = vmatpush1.msra.mxu0 0.0
        %1597 = vmatprep.subr.mxu0 0.0
        %1598 = vmatpush1.msra.mxu0 0.0
        %1599 = vmatprep.subr.mxu0 0.0
        %1600 = vmatpush1.msra.mxu0 0.0
        %1601 = vmatprep.subr.mxu0 0.0
        %1602 = vmatpush1.msra.mxu0 0.0
        %1603 = vmatprep.subr.mxu0 0.0
        %1604 = vmatpush1.msra.mxu0 0.0
        %1605 = vmatprep.subr.mxu0 0.0
        %1606 = vmatpush1.msra.mxu0 0.0
        %1607 = vmatprep.subr.mxu0 0.0
        %1608 = vmatpush1.msra.mxu0 0.0
        %1609 = vmatprep.subr.mxu0 0.0
        %1610 = vmatpush1.msra.mxu0 0.0
        %v1611 = vand.u32 %v987, 4294901760
        %1612 = vmatprep.subr.mxu0 %v1611
        %v1613 = vand.u32 %v986, 4294901760
        %1614 = vmatpush1.msra.mxu0 %v1613
        %v1615 = vand.u32 %v983, 4294901760
        %1616 = vmatprep.subr.mxu0 %v1615
        %v1617 = vand.u32 %v982, 4294901760
        %1618 = vmatpush1.msra.mxu0 %v1617
        %v1619 = vand.u32 %v979, 4294901760
        %1620 = vmatprep.subr.mxu0 %v1619
        %v1621 = vand.u32 %v978, 4294901760
        %1622 = vmatpush1.msra.mxu0 %v1621
        %v1623 = vand.u32 %v975, 4294901760
        %1624 = vmatprep.subr.mxu0 %v1623
        %v1625 = vand.u32 %v974, 4294901760
        %1626 = vmatpush1.msra.mxu0 %v1625
        %1627 = vmatprep.subr.mxu0 0.0
        %1628 = vmatpush2.msra.mxu0 0.0
        %1629 = vmatprep.subr.mxu0 0.0
        %1630 = vmatpush2.msra.mxu0 0.0
        %1631 = vmatprep.subr.mxu0 0.0
        %1632 = vmatpush2.msra.mxu0 0.0
        %1633 = vmatprep.subr.mxu0 0.0
        %1634 = vmatpush2.msra.mxu0 0.0
        %1635 = vmatprep.subr.mxu0 0.0
        %1636 = vmatpush2.msra.mxu0 0.0
        %1637 = vmatprep.subr.mxu0 0.0
        %1638 = vmatpush2.msra.mxu0 0.0
        %1639 = vmatprep.subr.mxu0 0.0
        %1640 = vmatpush2.msra.mxu0 0.0
        %1641 = vmatprep.subr.mxu0 0.0
        %1642 = vmatpush2.msra.mxu0 0.0
        %1643 = vmatprep.subr.mxu0 0.0
        %1644 = vmatpush2.msra.mxu0 0.0
        %1645 = vmatprep.subr.mxu0 0.0
        %1646 = vmatpush2.msra.mxu0 0.0
        %1647 = vmatprep.subr.mxu0 0.0
        %1648 = vmatpush2.msra.mxu0 0.0
        %1649 = vmatprep.subr.mxu0 0.0
        %1650 = vmatpush2.msra.mxu0 0.0
        %1651 = vmatprep.subr.mxu0 0.0
        %1652 = vmatpush2.msra.mxu0 0.0
        %1653 = vmatprep.subr.mxu0 0.0
        %1654 = vmatpush2.msra.mxu0 0.0
        %1655 = vmatprep.subr.mxu0 0.0
        %1656 = vmatpush2.msra.mxu0 0.0
        %1657 = vmatprep.subr.mxu0 0.0
        %1658 = vmatpush2.msra.mxu0 0.0
        %1659 = vmatprep.mubr.f32.mxu0 0.0
        %v1660 = vand.u32 %v990, 4294901760
        %v1661 = vsub.f32 %v990, %v1660
        %v1662 = vand.u32 %v1661, 4294901760
        %v1663 = vsub.f32 %v1661, %v1662
        %v1664 = vand.u32 %v1663, 4294901760
        %1665 = vmatmul.mubr.f32.gmra.mxu0 %v1664
        %v1666 = vpop.f32.mrf.mxu0
        %v1667 = vadd.f32 0.0, %v1666
        %v1668 = vpop.f32.mrf.mxu0
        %v1669 = vadd.f32 0.0, %v1668
        %1670 = vmatprep.mubr.f32.mxu0 0.0
        %v1671 = vand.u32 %v993, 4294901760
        %v1672 = vsub.f32 %v993, %v1671
        %v1673 = vand.u32 %v1672, 4294901760
        %v1674 = vsub.f32 %v1672, %v1673
        %v1675 = vand.u32 %v1674, 4294901760
        %1676 = vmatmul.mubr.f32.gmra.mxu0 %v1675
        %v1677 = vpop.f32.mrf.mxu0
        %v1678 = vadd.f32 0.0, %v1677
        %v1679 = vpop.f32.mrf.mxu0
        %v1680 = vadd.f32 0.0, %v1679
        %1681 = vdwg.mxu0
        %1682 = vmatprep.subr.mxu0 0.0
        %1683 = vmatpush1.msra.mxu0 0.0
        %1684 = vmatprep.subr.mxu0 0.0
        %1685 = vmatpush1.msra.mxu0 0.0
        %1686 = vmatprep.subr.mxu0 0.0
        %1687 = vmatpush1.msra.mxu0 0.0
        %1688 = vmatprep.subr.mxu0 0.0
        %1689 = vmatpush1.msra.mxu0 0.0
        %1690 = vmatprep.subr.mxu0 0.0
        %1691 = vmatpush1.msra.mxu0 0.0
        %1692 = vmatprep.subr.mxu0 0.0
        %1693 = vmatpush1.msra.mxu0 0.0
        %1694 = vmatprep.subr.mxu0 0.0
        %1695 = vmatpush1.msra.mxu0 0.0
        %1696 = vmatprep.subr.mxu0 0.0
        %1697 = vmatpush1.msra.mxu0 0.0
        %1698 = vmatprep.subr.mxu0 0.0
        %1699 = vmatpush1.msra.mxu0 0.0
        %1700 = vmatprep.subr.mxu0 0.0
        %1701 = vmatpush1.msra.mxu0 0.0
        %1702 = vmatprep.subr.mxu0 0.0
        %1703 = vmatpush1.msra.mxu0 0.0
        %1704 = vmatprep.subr.mxu0 0.0
        %1705 = vmatpush1.msra.mxu0 0.0
        %v1706 = vand.u32 %v987, 4294901760
        %v1707 = vsub.f32 %v987, %v1706
        %v1708 = vand.u32 %v1707, 4294901760
        %v1709 = vsub.f32 %v1707, %v1708
        %v1710 = vand.u32 %v1709, 4294901760
        %1711 = vmatprep.subr.mxu0 %v1710
        %v1712 = vand.u32 %v986, 4294901760
        %v1713 = vsub.f32 %v986, %v1712
        %v1714 = vand.u32 %v1713, 4294901760
        %v1715 = vsub.f32 %v1713, %v1714
        %v1716 = vand.u32 %v1715, 4294901760
        %1717 = vmatpush1.msra.mxu0 %v1716
        %v1718 = vand.u32 %v983, 4294901760
        %v1719 = vsub.f32 %v983, %v1718
        %v1720 = vand.u32 %v1719, 4294901760
        %v1721 = vsub.f32 %v1719, %v1720
        %v1722 = vand.u32 %v1721, 4294901760
        %1723 = vmatprep.subr.mxu0 %v1722
        %v1724 = vand.u32 %v982, 4294901760
        %v1725 = vsub.f32 %v982, %v1724
        %v1726 = vand.u32 %v1725, 4294901760
        %v1727 = vsub.f32 %v1725, %v1726
        %v1728 = vand.u32 %v1727, 4294901760
        %1729 = vmatpush1.msra.mxu0 %v1728
        %v1730 = vand.u32 %v979, 4294901760
        %v1731 = vsub.f32 %v979, %v1730
        %v1732 = vand.u32 %v1731, 4294901760
        %v1733 = vsub.f32 %v1731, %v1732
        %v1734 = vand.u32 %v1733, 4294901760
        %1735 = vmatprep.subr.mxu0 %v1734
        %v1736 = vand.u32 %v978, 4294901760
        %v1737 = vsub.f32 %v978, %v1736
        %v1738 = vand.u32 %v1737, 4294901760
        %v1739 = vsub.f32 %v1737, %v1738
        %v1740 = vand.u32 %v1739, 4294901760
        %1741 = vmatpush1.msra.mxu0 %v1740
        %v1742 = vand.u32 %v975, 4294901760
        %v1743 = vsub.f32 %v975, %v1742
        %v1744 = vand.u32 %v1743, 4294901760
        %v1745 = vsub.f32 %v1743, %v1744
        %v1746 = vand.u32 %v1745, 4294901760
        %1747 = vmatprep.subr.mxu0 %v1746
        %v1748 = vand.u32 %v974, 4294901760
        %v1749 = vsub.f32 %v974, %v1748
        %v1750 = vand.u32 %v1749, 4294901760
        %v1751 = vsub.f32 %v1749, %v1750
        %v1752 = vand.u32 %v1751, 4294901760
        %1753 = vmatpush1.msra.mxu0 %v1752
        %1754 = vmatprep.subr.mxu0 0.0
        %1755 = vmatpush2.msra.mxu0 0.0
        %1756 = vmatprep.subr.mxu0 0.0
        %1757 = vmatpush2.msra.mxu0 0.0
        %1758 = vmatprep.subr.mxu0 0.0
        %1759 = vmatpush2.msra.mxu0 0.0
        %1760 = vmatprep.subr.mxu0 0.0
        %1761 = vmatpush2.msra.mxu0 0.0
        %1762 = vmatprep.subr.mxu0 0.0
        %1763 = vmatpush2.msra.mxu0 0.0
        %1764 = vmatprep.subr.mxu0 0.0
        %1765 = vmatpush2.msra.mxu0 0.0
        %1766 = vmatprep.subr.mxu0 0.0
        %1767 = vmatpush2.msra.mxu0 0.0
        %1768 = vmatprep.subr.mxu0 0.0
        %1769 = vmatpush2.msra.mxu0 0.0
        %1770 = vmatprep.subr.mxu0 0.0
        %1771 = vmatpush2.msra.mxu0 0.0
        %1772 = vmatprep.subr.mxu0 0.0
        %1773 = vmatpush2.msra.mxu0 0.0
        %1774 = vmatprep.subr.mxu0 0.0
        %1775 = vmatpush2.msra.mxu0 0.0
        %1776 = vmatprep.subr.mxu0 0.0
        %1777 = vmatpush2.msra.mxu0 0.0
        %1778 = vmatprep.subr.mxu0 0.0
        %1779 = vmatpush2.msra.mxu0 0.0
        %1780 = vmatprep.subr.mxu0 0.0
        %1781 = vmatpush2.msra.mxu0 0.0
        %1782 = vmatprep.subr.mxu0 0.0
        %1783 = vmatpush2.msra.mxu0 0.0
        %1784 = vmatprep.subr.mxu0 0.0
        %1785 = vmatpush2.msra.mxu0 0.0
        %1786 = vmatprep.mubr.f32.mxu0 0.0
        %v1787 = vand.u32 %v990, 4294901760
        %1788 = vmatmul.mubr.f32.gmra.mxu0 %v1787
        %v1789 = vpop.f32.mrf.mxu0
        %v1790 = vadd.f32 %v1667, %v1789
        %v1791 = vpop.f32.mrf.mxu0
        %v1792 = vadd.f32 %v1669, %v1791
        %1793 = vmatprep.mubr.f32.mxu0 0.0
        %v1794 = vand.u32 %v993, 4294901760
        %1795 = vmatmul.mubr.f32.gmra.mxu0 %v1794
        %v1796 = vpop.f32.mrf.mxu0
        %v1797 = vadd.f32 %v1678, %v1796
        %v1798 = vpop.f32.mrf.mxu0
        %v1799 = vadd.f32 %v1680, %v1798
        %1800 = vdwg.mxu0
        %1801 = vmatprep.subr.mxu0 0.0
        %1802 = vmatpush1.msra.mxu0 0.0
        %1803 = vmatprep.subr.mxu0 0.0
        %1804 = vmatpush1.msra.mxu0 0.0
        %1805 = vmatprep.subr.mxu0 0.0
        %1806 = vmatpush1.msra.mxu0 0.0
        %1807 = vmatprep.subr.mxu0 0.0
        %1808 = vmatpush1.msra.mxu0 0.0
        %1809 = vmatprep.subr.mxu0 0.0
        %1810 = vmatpush1.msra.mxu0 0.0
        %1811 = vmatprep.subr.mxu0 0.0
        %1812 = vmatpush1.msra.mxu0 0.0
        %1813 = vmatprep.subr.mxu0 0.0
        %1814 = vmatpush1.msra.mxu0 0.0
        %1815 = vmatprep.subr.mxu0 0.0
        %1816 = vmatpush1.msra.mxu0 0.0
        %1817 = vmatprep.subr.mxu0 0.0
        %1818 = vmatpush1.msra.mxu0 0.0
        %1819 = vmatprep.subr.mxu0 0.0
        %1820 = vmatpush1.msra.mxu0 0.0
        %1821 = vmatprep.subr.mxu0 0.0
        %1822 = vmatpush1.msra.mxu0 0.0
        %1823 = vmatprep.subr.mxu0 0.0
        %1824 = vmatpush1.msra.mxu0 0.0
        %v1825 = vand.u32 %v987, 4294901760
        %v1826 = vsub.f32 %v987, %v1825
        %1827 = vmatprep.subr.mxu0 %v1826
        %v1828 = vand.u32 %v986, 4294901760
        %v1829 = vsub.f32 %v986, %v1828
        %1830 = vmatpush1.msra.mxu0 %v1829
        %v1831 = vand.u32 %v983, 4294901760
        %v1832 = vsub.f32 %v983, %v1831
        %1833 = vmatprep.subr.mxu0 %v1832
        %v1834 = vand.u32 %v982, 4294901760
        %v1835 = vsub.f32 %v982, %v1834
        %1836 = vmatpush1.msra.mxu0 %v1835
        %v1837 = vand.u32 %v979, 4294901760
        %v1838 = vsub.f32 %v979, %v1837
        %1839 = vmatprep.subr.mxu0 %v1838
        %v1840 = vand.u32 %v978, 4294901760
        %v1841 = vsub.f32 %v978, %v1840
        %1842 = vmatpush1.msra.mxu0 %v1841
        %v1843 = vand.u32 %v975, 4294901760
        %v1844 = vsub.f32 %v975, %v1843
        %1845 = vmatprep.subr.mxu0 %v1844
        %v1846 = vand.u32 %v974, 4294901760
        %v1847 = vsub.f32 %v974, %v1846
        %1848 = vmatpush1.msra.mxu0 %v1847
        %1849 = vmatprep.subr.mxu0 0.0
        %1850 = vmatpush2.msra.mxu0 0.0
        %1851 = vmatprep.subr.mxu0 0.0
        %1852 = vmatpush2.msra.mxu0 0.0
        %1853 = vmatprep.subr.mxu0 0.0
        %1854 = vmatpush2.msra.mxu0 0.0
        %1855 = vmatprep.subr.mxu0 0.0
        %1856 = vmatpush2.msra.mxu0 0.0
        %1857 = vmatprep.subr.mxu0 0.0
        %1858 = vmatpush2.msra.mxu0 0.0
        %1859 = vmatprep.subr.mxu0 0.0
        %1860 = vmatpush2.msra.mxu0 0.0
        %1861 = vmatprep.subr.mxu0 0.0
        %1862 = vmatpush2.msra.mxu0 0.0
        %1863 = vmatprep.subr.mxu0 0.0
        %1864 = vmatpush2.msra.mxu0 0.0
        %1865 = vmatprep.subr.mxu0 0.0
        %1866 = vmatpush2.msra.mxu0 0.0
        %1867 = vmatprep.subr.mxu0 0.0
        %1868 = vmatpush2.msra.mxu0 0.0
        %1869 = vmatprep.subr.mxu0 0.0
        %1870 = vmatpush2.msra.mxu0 0.0
        %1871 = vmatprep.subr.mxu0 0.0
        %1872 = vmatpush2.msra.mxu0 0.0
        %1873 = vmatprep.subr.mxu0 0.0
        %1874 = vmatpush2.msra.mxu0 0.0
        %1875 = vmatprep.subr.mxu0 0.0
        %1876 = vmatpush2.msra.mxu0 0.0
        %1877 = vmatprep.subr.mxu0 0.0
        %1878 = vmatpush2.msra.mxu0 0.0
        %1879 = vmatprep.subr.mxu0 0.0
        %1880 = vmatpush2.msra.mxu0 0.0
        %1881 = vmatprep.mubr.f32.mxu0 0.0
        %v1882 = vand.u32 %v990, 4294901760
        %v1883 = vsub.f32 %v990, %v1882
        %1884 = vmatmul.mubr.f32.gmra.mxu0 %v1883
        %v1885 = vpop.f32.mrf.mxu0
        %v1886 = vadd.f32 %v1790, %v1885
        %v1887 = vpop.f32.mrf.mxu0
        %v1888 = vadd.f32 %v1792, %v1887
        %1889 = vmatprep.mubr.f32.mxu0 0.0
        %v1890 = vand.u32 %v993, 4294901760
        %v1891 = vsub.f32 %v993, %v1890
        %1892 = vmatmul.mubr.f32.gmra.mxu0 %v1891
        %v1893 = vpop.f32.mrf.mxu0
        %v1894 = vadd.f32 %v1797, %v1893
        %v1895 = vpop.f32.mrf.mxu0
        %v1896 = vadd.f32 %v1799, %v1895
        %1897 = vdwg.mxu0
        %1898 = vmatprep.subr.mxu0 0.0
        %1899 = vmatpush1.msra.mxu0 0.0
        %1900 = vmatprep.subr.mxu0 0.0
        %1901 = vmatpush1.msra.mxu0 0.0
        %1902 = vmatprep.subr.mxu0 0.0
        %1903 = vmatpush1.msra.mxu0 0.0
        %1904 = vmatprep.subr.mxu0 0.0
        %1905 = vmatpush1.msra.mxu0 0.0
        %1906 = vmatprep.subr.mxu0 0.0
        %1907 = vmatpush1.msra.mxu0 0.0
        %1908 = vmatprep.subr.mxu0 0.0
        %1909 = vmatpush1.msra.mxu0 0.0
        %1910 = vmatprep.subr.mxu0 0.0
        %1911 = vmatpush1.msra.mxu0 0.0
        %1912 = vmatprep.subr.mxu0 0.0
        %1913 = vmatpush1.msra.mxu0 0.0
        %1914 = vmatprep.subr.mxu0 0.0
        %1915 = vmatpush1.msra.mxu0 0.0
        %1916 = vmatprep.subr.mxu0 0.0
        %1917 = vmatpush1.msra.mxu0 0.0
        %1918 = vmatprep.subr.mxu0 0.0
        %1919 = vmatpush1.msra.mxu0 0.0
        %1920 = vmatprep.subr.mxu0 0.0
        %1921 = vmatpush1.msra.mxu0 0.0
        %v1922 = vand.u32 %v987, 4294901760
        %1923 = vmatprep.subr.mxu0 %v1922
        %v1924 = vand.u32 %v986, 4294901760
        %1925 = vmatpush1.msra.mxu0 %v1924
        %v1926 = vand.u32 %v983, 4294901760
        %1927 = vmatprep.subr.mxu0 %v1926
        %v1928 = vand.u32 %v982, 4294901760
        %1929 = vmatpush1.msra.mxu0 %v1928
        %v1930 = vand.u32 %v979, 4294901760
        %1931 = vmatprep.subr.mxu0 %v1930
        %v1932 = vand.u32 %v978, 4294901760
        %1933 = vmatpush1.msra.mxu0 %v1932
        %v1934 = vand.u32 %v975, 4294901760
        %1935 = vmatprep.subr.mxu0 %v1934
        %v1936 = vand.u32 %v974, 4294901760
        %1937 = vmatpush1.msra.mxu0 %v1936
        %1938 = vmatprep.subr.mxu0 0.0
        %1939 = vmatpush2.msra.mxu0 0.0
        %1940 = vmatprep.subr.mxu0 0.0
        %1941 = vmatpush2.msra.mxu0 0.0
        %1942 = vmatprep.subr.mxu0 0.0
        %1943 = vmatpush2.msra.mxu0 0.0
        %1944 = vmatprep.subr.mxu0 0.0
        %1945 = vmatpush2.msra.mxu0 0.0
        %1946 = vmatprep.subr.mxu0 0.0
        %1947 = vmatpush2.msra.mxu0 0.0
        %1948 = vmatprep.subr.mxu0 0.0
        %1949 = vmatpush2.msra.mxu0 0.0
        %1950 = vmatprep.subr.mxu0 0.0
        %1951 = vmatpush2.msra.mxu0 0.0
        %1952 = vmatprep.subr.mxu0 0.0
        %1953 = vmatpush2.msra.mxu0 0.0
        %1954 = vmatprep.subr.mxu0 0.0
        %1955 = vmatpush2.msra.mxu0 0.0
        %1956 = vmatprep.subr.mxu0 0.0
        %1957 = vmatpush2.msra.mxu0 0.0
        %1958 = vmatprep.subr.mxu0 0.0
        %1959 = vmatpush2.msra.mxu0 0.0
        %1960 = vmatprep.subr.mxu0 0.0
        %1961 = vmatpush2.msra.mxu0 0.0
        %1962 = vmatprep.subr.mxu0 0.0
        %1963 = vmatpush2.msra.mxu0 0.0
        %1964 = vmatprep.subr.mxu0 0.0
        %1965 = vmatpush2.msra.mxu0 0.0
        %1966 = vmatprep.subr.mxu0 0.0
        %1967 = vmatpush2.msra.mxu0 0.0
        %1968 = vmatprep.subr.mxu0 0.0
        %1969 = vmatpush2.msra.mxu0 0.0
        %1970 = vmatprep.mubr.f32.mxu0 0.0
        %v1971 = vand.u32 %v990, 4294901760
        %v1972 = vsub.f32 %v990, %v1971
        %v1973 = vand.u32 %v1972, 4294901760
        %1974 = vmatmul.mubr.f32.gmra.mxu0 %v1973
        %v1975 = vpop.f32.mrf.mxu0
        %v1976 = vadd.f32 %v1886, %v1975
        %v1977 = vpop.f32.mrf.mxu0
        %v1978 = vadd.f32 %v1888, %v1977
        %1979 = vmatprep.mubr.f32.mxu0 0.0
        %v1980 = vand.u32 %v993, 4294901760
        %v1981 = vsub.f32 %v993, %v1980
        %v1982 = vand.u32 %v1981, 4294901760
        %1983 = vmatmul.mubr.f32.gmra.mxu0 %v1982
        %v1984 = vpop.f32.mrf.mxu0
        %v1985 = vadd.f32 %v1894, %v1984
        %v1986 = vpop.f32.mrf.mxu0
        %v1987 = vadd.f32 %v1896, %v1986
        %1988 = vdwg.mxu0
        %1989 = vmatprep.subr.mxu0 0.0
        %1990 = vmatpush1.msra.mxu0 0.0
        %1991 = vmatprep.subr.mxu0 0.0
        %1992 = vmatpush1.msra.mxu0 0.0
        %1993 = vmatprep.subr.mxu0 0.0
        %1994 = vmatpush1.msra.mxu0 0.0
        %1995 = vmatprep.subr.mxu0 0.0
        %1996 = vmatpush1.msra.mxu0 0.0
        %1997 = vmatprep.subr.mxu0 0.0
        %1998 = vmatpush1.msra.mxu0 0.0
        %1999 = vmatprep.subr.mxu0 0.0
        %2000 = vmatpush1.msra.mxu0 0.0
        %2001 = vmatprep.subr.mxu0 0.0
        %2002 = vmatpush1.msra.mxu0 0.0
        %2003 = vmatprep.subr.mxu0 0.0
        %2004 = vmatpush1.msra.mxu0 0.0
        %2005 = vmatprep.subr.mxu0 0.0
        %2006 = vmatpush1.msra.mxu0 0.0
        %2007 = vmatprep.subr.mxu0 0.0
        %2008 = vmatpush1.msra.mxu0 0.0
        %2009 = vmatprep.subr.mxu0 0.0
        %2010 = vmatpush1.msra.mxu0 0.0
        %2011 = vmatprep.subr.mxu0 0.0
        %2012 = vmatpush1.msra.mxu0 0.0
        %v2013 = vand.u32 %v987, 4294901760
        %v2014 = vsub.f32 %v987, %v2013
        %v2015 = vand.u32 %v2014, 4294901760
        %2016 = vmatprep.subr.mxu0 %v2015
        %v2017 = vand.u32 %v986, 4294901760
        %v2018 = vsub.f32 %v986, %v2017
        %v2019 = vand.u32 %v2018, 4294901760
        %2020 = vmatpush1.msra.mxu0 %v2019
        %v2021 = vand.u32 %v983, 4294901760
        %v2022 = vsub.f32 %v983, %v2021
        %v2023 = vand.u32 %v2022, 4294901760
        %2024 = vmatprep.subr.mxu0 %v2023
        %v2025 = vand.u32 %v982, 4294901760
        %v2026 = vsub.f32 %v982, %v2025
        %v2027 = vand.u32 %v2026, 4294901760
        %2028 = vmatpush1.msra.mxu0 %v2027
        %v2029 = vand.u32 %v979, 4294901760
        %v2030 = vsub.f32 %v979, %v2029
        %v2031 = vand.u32 %v2030, 4294901760
        %2032 = vmatprep.subr.mxu0 %v2031
        %v2033 = vand.u32 %v978, 4294901760
        %v2034 = vsub.f32 %v978, %v2033
        %v2035 = vand.u32 %v2034, 4294901760
        %2036 = vmatpush1.msra.mxu0 %v2035
        %v2037 = vand.u32 %v975, 4294901760
        %v2038 = vsub.f32 %v975, %v2037
        %v2039 = vand.u32 %v2038, 4294901760
        %2040 = vmatprep.subr.mxu0 %v2039
        %v2041 = vand.u32 %v974, 4294901760
        %v2042 = vsub.f32 %v974, %v2041
        %v2043 = vand.u32 %v2042, 4294901760
        %2044 = vmatpush1.msra.mxu0 %v2043
        %2045 = vmatprep.subr.mxu0 0.0
        %2046 = vmatpush2.msra.mxu0 0.0
        %2047 = vmatprep.subr.mxu0 0.0
        %2048 = vmatpush2.msra.mxu0 0.0
        %2049 = vmatprep.subr.mxu0 0.0
        %2050 = vmatpush2.msra.mxu0 0.0
        %2051 = vmatprep.subr.mxu0 0.0
        %2052 = vmatpush2.msra.mxu0 0.0
        %2053 = vmatprep.subr.mxu0 0.0
        %2054 = vmatpush2.msra.mxu0 0.0
        %2055 = vmatprep.subr.mxu0 0.0
        %2056 = vmatpush2.msra.mxu0 0.0
        %2057 = vmatprep.subr.mxu0 0.0
        %2058 = vmatpush2.msra.mxu0 0.0
        %2059 = vmatprep.subr.mxu0 0.0
        %2060 = vmatpush2.msra.mxu0 0.0
        %2061 = vmatprep.subr.mxu0 0.0
        %2062 = vmatpush2.msra.mxu0 0.0
        %2063 = vmatprep.subr.mxu0 0.0
        %2064 = vmatpush2.msra.mxu0 0.0
        %2065 = vmatprep.subr.mxu0 0.0
        %2066 = vmatpush2.msra.mxu0 0.0
        %2067 = vmatprep.subr.mxu0 0.0
        %2068 = vmatpush2.msra.mxu0 0.0
        %2069 = vmatprep.subr.mxu0 0.0
        %2070 = vmatpush2.msra.mxu0 0.0
        %2071 = vmatprep.subr.mxu0 0.0
        %2072 = vmatpush2.msra.mxu0 0.0
        %2073 = vmatprep.subr.mxu0 0.0
        %2074 = vmatpush2.msra.mxu0 0.0
        %2075 = vmatprep.subr.mxu0 0.0
        %2076 = vmatpush2.msra.mxu0 0.0
        %2077 = vmatprep.mubr.f32.mxu0 0.0
        %v2078 = vand.u32 %v990, 4294901760
        %2079 = vmatmul.mubr.f32.gmra.mxu0 %v2078
        %v2080 = vpop.f32.mrf.mxu0
        %v2081 = vadd.f32 %v1976, %v2080
        %v2082 = vpop.f32.mrf.mxu0
        %v2083 = vadd.f32 %v1978, %v2082
        %2084 = vmatprep.mubr.f32.mxu0 0.0
        %v2085 = vand.u32 %v993, 4294901760
        %2086 = vmatmul.mubr.f32.gmra.mxu0 %v2085
        %v2087 = vpop.f32.mrf.mxu0
        %v2088 = vadd.f32 %v1985, %v2087
        %v2089 = vpop.f32.mrf.mxu0
        %v2090 = vadd.f32 %v1987, %v2089
        %2091 = vdwg.mxu0
        %2092 = vmatprep.subr.mxu0 0.0
        %2093 = vmatpush1.msra.mxu0 0.0
        %2094 = vmatprep.subr.mxu0 0.0
        %2095 = vmatpush1.msra.mxu0 0.0
        %2096 = vmatprep.subr.mxu0 0.0
        %2097 = vmatpush1.msra.mxu0 0.0
        %2098 = vmatprep.subr.mxu0 0.0
        %2099 = vmatpush1.msra.mxu0 0.0
        %2100 = vmatprep.subr.mxu0 0.0
        %2101 = vmatpush1.msra.mxu0 0.0
        %2102 = vmatprep.subr.mxu0 0.0
        %2103 = vmatpush1.msra.mxu0 0.0
        %2104 = vmatprep.subr.mxu0 0.0
        %2105 = vmatpush1.msra.mxu0 0.0
        %2106 = vmatprep.subr.mxu0 0.0
        %2107 = vmatpush1.msra.mxu0 0.0
        %2108 = vmatprep.subr.mxu0 0.0
        %2109 = vmatpush1.msra.mxu0 0.0
        %2110 = vmatprep.subr.mxu0 0.0
        %2111 = vmatpush1.msra.mxu0 0.0
        %2112 = vmatprep.subr.mxu0 0.0
        %2113 = vmatpush1.msra.mxu0 0.0
        %2114 = vmatprep.subr.mxu0 0.0
        %2115 = vmatpush1.msra.mxu0 0.0
        %v2116 = vand.u32 %v987, 4294901760
        %2117 = vmatprep.subr.mxu0 %v2116
        %v2118 = vand.u32 %v986, 4294901760
        %2119 = vmatpush1.msra.mxu0 %v2118
        %v2120 = vand.u32 %v983, 4294901760
        %2121 = vmatprep.subr.mxu0 %v2120
        %v2122 = vand.u32 %v982, 4294901760
        %2123 = vmatpush1.msra.mxu0 %v2122
        %v2124 = vand.u32 %v979, 4294901760
        %2125 = vmatprep.subr.mxu0 %v2124
        %v2126 = vand.u32 %v978, 4294901760
        %2127 = vmatpush1.msra.mxu0 %v2126
        %v2128 = vand.u32 %v975, 4294901760
        %2129 = vmatprep.subr.mxu0 %v2128
        %v2130 = vand.u32 %v974, 4294901760
        %2131 = vmatpush1.msra.mxu0 %v2130
        %2132 = vmatprep.subr.mxu0 0.0
        %2133 = vmatpush2.msra.mxu0 0.0
        %2134 = vmatprep.subr.mxu0 0.0
        %2135 = vmatpush2.msra.mxu0 0.0
        %2136 = vmatprep.subr.mxu0 0.0
        %2137 = vmatpush2.msra.mxu0 0.0
        %2138 = vmatprep.subr.mxu0 0.0
        %2139 = vmatpush2.msra.mxu0 0.0
        %2140 = vmatprep.subr.mxu0 0.0
        %2141 = vmatpush2.msra.mxu0 0.0
        %2142 = vmatprep.subr.mxu0 0.0
        %2143 = vmatpush2.msra.mxu0 0.0
        %2144 = vmatprep.subr.mxu0 0.0
        %2145 = vmatpush2.msra.mxu0 0.0
        %2146 = vmatprep.subr.mxu0 0.0
        %2147 = vmatpush2.msra.mxu0 0.0
        %2148 = vmatprep.subr.mxu0 0.0
        %2149 = vmatpush2.msra.mxu0 0.0
        %2150 = vmatprep.subr.mxu0 0.0
        %2151 = vmatpush2.msra.mxu0 0.0
        %2152 = vmatprep.subr.mxu0 0.0
        %2153 = vmatpush2.msra.mxu0 0.0
        %2154 = vmatprep.subr.mxu0 0.0
        %2155 = vmatpush2.msra.mxu0 0.0
        %2156 = vmatprep.subr.mxu0 0.0
        %2157 = vmatpush2.msra.mxu0 0.0
        %2158 = vmatprep.subr.mxu0 0.0
        %2159 = vmatpush2.msra.mxu0 0.0
        %2160 = vmatprep.subr.mxu0 0.0
        %2161 = vmatpush2.msra.mxu0 0.0
        %2162 = vmatprep.subr.mxu0 0.0
        %2163 = vmatpush2.msra.mxu0 0.0
        %2164 = vmatprep.mubr.f32.mxu0 0.0
        %v2165 = vand.u32 %v990, 4294901760
        %2166 = vmatmul.mubr.f32.gmra.mxu0 %v2165
        %v2167 = vpop.f32.mrf.mxu0
        %v2168 = vadd.f32 %v2081, %v2167
        %v2169 = vpop.f32.mrf.mxu0
        %v2170 = vadd.f32 %v2083, %v2169
        %2171 = vmatprep.mubr.f32.mxu0 0.0
        %v2172 = vand.u32 %v993, 4294901760
        %2173 = vmatmul.mubr.f32.gmra.mxu0 %v2172
        %v2174 = vpop.f32.mrf.mxu0
        %v2175 = vadd.f32 %v2088, %v2174
        %v2176 = vpop.f32.mrf.mxu0
        %v2177 = vadd.f32 %v2090, %v2176
        %2178 = vdwg.mxu0
        %v2179 = vlaneseq
        %v2180 = vshrl.u32 %v2179, 7
        %v2181 = vsub.s32 0, %v2180
        %v2182 = vrot.slane %v216, %v2181
        %v2183 = vlaneseq
        %v2184 = vshrl.u32 %v2183, 7
        %v2185 = vsub.s32 1, %v2184
        %v2186 = vrot.slane %v216, %v2185
        %v2187 = vlaneseq
        %v2188 = vshrl.u32 %v2187, 7
        %v2189 = vsub.s32 2, %v2188
        %v2190 = vrot.slane %v216, %v2189
        %v2191 = vlaneseq
        %v2192 = vshrl.u32 %v2191, 7
        %v2193 = vsub.s32 3, %v2192
        %v2194 = vrot.slane %v216, %v2193
        %vm2195 = vcmp.eq.s32.totalorder %v920, %v2182
        %vm2196 = vcmp.eq.s32.totalorder %v920, %v2186
        %vm2197 = vcmp.eq.s32.totalorder %v920, %v2190
        %vm2198 = vcmp.eq.s32.totalorder %v920, %v2194
        %vm2199 = vcmp.eq.s32.totalorder %v921, %v2182
        %vm2200 = vcmp.eq.s32.totalorder %v921, %v2186
        %vm2201 = vcmp.eq.s32.totalorder %v921, %v2190
        %vm2202 = vcmp.eq.s32.totalorder %v921, %v2194
        %v2203 = vsel %vm2195, 1, 0
        %v2204 = vsel %vm2196, 1, 0
        %v2205 = vsel %vm2197, 1, 0
        %v2206 = vsel %vm2198, 1, 0
        %v2207 = vsel %vm2199, 1, 0
        %v2208 = vsel %vm2200, 1, 0
        %v2209 = vsel %vm2201, 1, 0
        %v2210 = vsel %vm2202, 1, 0
        %v2211 = vcvt.s32.f32 %v2203
        %v2212 = vcvt.s32.f32 %v2204
        %v2213 = vcvt.s32.f32 %v2205
        %v2214 = vcvt.s32.f32 %v2206
        %v2215 = vcvt.s32.f32 %v2207
        %v2216 = vcvt.s32.f32 %v2208
        %v2217 = vcvt.s32.f32 %v2209
        %v2218 = vcvt.s32.f32 %v2210
        %v2219 = vmul.f32 %v1576, %v2211
        %v2220 = vmul.f32 %v1578, %v2212
        %v2221 = vmul.f32 %v2168, %v2213
        %v2222 = vmul.f32 %v2170, %v2214
        %v2223 = vmul.f32 %v1583, %v2215
        %v2224 = vmul.f32 %v1585, %v2216
        %v2225 = vmul.f32 %v2175, %v2217
        %v2226 = vmul.f32 %v2177, %v2218
        %v2227 = vadd.f32 %v2219, %v2223
        %v2228 = vrot.slane %v2227, 4
        %v2229 = vadd.f32 %v2227, %v2228
        %v2230 = vrot.slane %v2229, 2
        %v2231 = vadd.f32 %v2229, %v2230
        %v2232 = vrot.slane %v2231, 1
        %v2233 = vadd.f32 %v2231, %v2232
        %v2234 = vadd.f32 %v2220, %v2224
        %v2235 = vrot.slane %v2234, 4
        %v2236 = vadd.f32 %v2234, %v2235
        %v2237 = vrot.slane %v2236, 2
        %v2238 = vadd.f32 %v2236, %v2237
        %v2239 = vrot.slane %v2238, 1
        %v2240 = vadd.f32 %v2238, %v2239
        %v2241 = vadd.f32 %v2221, %v2225
        %v2242 = vrot.slane %v2241, 4
        %v2243 = vadd.f32 %v2241, %v2242
        %v2244 = vrot.slane %v2243, 2
        %v2245 = vadd.f32 %v2243, %v2244
        %v2246 = vrot.slane %v2245, 1
        %v2247 = vadd.f32 %v2245, %v2246
        %v2248 = vadd.f32 %v2222, %v2226
        %v2249 = vrot.slane %v2248, 4
        %v2250 = vadd.f32 %v2248, %v2249
        %v2251 = vrot.slane %v2250, 2
        %v2252 = vadd.f32 %v2250, %v2251
        %v2253 = vrot.slane %v2252, 1
        %v2254 = vadd.f32 %v2252, %v2253
        %v2259 = vcombine.low %v2233, %v2240
        %v2260 = vcombine.low %v2247, %v2254
        %v2262 = vunpack.c.l.s4 1966171168
        %v2263 = vunpack.c.0.s8 %v2262
        %v2264 = vlaneseq
        %v2265 = vshrl.u32 %v2264, 7
        %v2266 = vsub.s32 %v2263, %v2265
        %v2267 = vrot.slane %v2259, %v2266
        %v2269 = vunpack.c.l.s4 1966171168
        %v2270 = vunpack.c.0.s8 %v2269
        %v2271 = vlaneseq
        %v2272 = vshrl.u32 %v2271, 7
        %v2273 = vsub.s32 %v2270, %v2272
        %v2274 = vrot.slane %v2260, %v2273
        %v2275 = vcombine.low %v2267, %v2274
        %v2277 = vunpack.c.l.s4 1966171168
        %v2278 = vunpack.c.0.s8 %v2277
        %v2279 = vlaneseq
        %v2280 = vshrl.u32 %v2279, 7
        %v2281 = vsub.s32 %v2278, %v2280
        %v2282 = vrot.slane %v2275, %v2281
        %v2284 = vlaneseq
        %vm2285 = vcmp.ge.s32.totalorder %v2284, 0
        %vm2286 = vcmp.lt.s32.totalorder %v2284, 512
        %vm2287 = vmand %vm2285, %vm2286
        %2288 = vst.msk [vmem:[%s203] sm:$0xf] %vm2287, %v2282
        %s2289 = sand.u32 %s120, 1
        %s2290 = scalar_lea.sflag [#allocation3], %s2289
        %s2291 = sand.u32 %s120, 1
        %s2292 = smul.addr %s2291, 4
        %s2293 = scalar_lea.vmem [#allocation2], %s2292
        // Predicated region
        $region37: #{tpu_custom_call.1} parent=35 // pred_check
          %p2294 = pneg %p130
        $region38: #{tpu_custom_call.1} parent=35 // pred_check_branch
          %2296 = sbr.rel (%p2294) target = $region40
        $region39: #{tpu_custom_call.1} parent=35 // pred_region
          %s2297 = smul.u32 4, %s18
          %s2299 = ssub.s32 64, 64
          %2300 = vsyncadd %s2290, %s2299
          %s2301 = smul.addr %s2297, 16
          %s2302 = scalar_lea.hbm %s4, %s2301
          %s2304 = sshll.u32 %s2293, 4
          %s2305 = int_to_ptr.vmem [resolvable:$true] %s2304
          %2307 = dma.vmem_to_hbm [thread:$0]  %s2305, 64, %s2302, %s2290
        $region40: #{tpu_custom_call.1} parent=35 // pred_fallthru
          _
      $region36: #{tpu_custom_call.1} parent=5 // pred_fallthru
        _
      %p2308 = scmp.le.s32.totalorder 2, %s13
      // Predicated region
      $region41: #{tpu_custom_call.1} parent=5 // pred_check
        %p2309 = pneg %p2308
      $region42: #{tpu_custom_call.1} parent=5 // pred_check_branch
        %2311 = sbr.rel (%p2309) target = $region44
      $region43: #{tpu_custom_call.1} parent=5 // pred_region
        %s2312 = ssub.s32 %s13, 2
        // Predicated region
        $region45: #{tpu_custom_call.1} parent=43 // pred_check
          %p2313 = pneg %p136
        $region46: #{tpu_custom_call.1} parent=43 // pred_check_branch
          %2315 = sbr.rel (%p2313) target = $region48
        $region47: #{tpu_custom_call.1} parent=43 // pred_region
          %s2316 = sand.u32 %s121, 1
          %s2317 = scalar_lea.sflag [#allocation3], %s2316
          %s2318 = sand.u32 %s121, 1
          %s2319 = smul.addr %s2318, 4
          %s2320 = scalar_lea.vmem [#allocation2], %s2319
          %2321 = dma.done %s2317, 64
        $region48: #{tpu_custom_call.1} parent=43 // pred_fallthru
          _
      $region44: #{tpu_custom_call.1} parent=5 // pred_fallthru
        _
    $region6: #{tpu_custom_call.1} parent=1 // loop_footer
      %s17 = sadd.s32 1, %s13
    $region7: #{tpu_custom_call.1} parent=1 // loop_footer_branch
      %12 = sbr.rel target = $region3
    $region8: #{tpu_custom_call.1} parent=1 // loop_exit
      _
    %2322 = vsyncpa [#allocation3], 1
    %s2323 = scalar_lea.sflag [#allocation3], 1
    %2324 = vsyncpa %s2323, 1

</llo_original>
